<compile_context>
chip_gen: v7x
topology: tpu7x:2x2x1
jax: 0.10.0
libtpu: 0.0.40
codegen_flags: <defaults>
</compile_context>

<pallas_src>
import functools

import numpy as np
import jax
import jax.numpy as jnp
from jax.experimental import pallas as pl
from jax.experimental.pallas import tpu as pltpu


FEAT_CH = 2048          # backbone output channels (required by nn.Linear(2048, 1))
NUM_CLASSES = 1         # echonet segmentation head emits a single class map
FC_COL = NUM_CLASSES    # column of the combined head weight holding fc_w
STRIDE = 4              # synthetic backbone output stride
LANE = 128
CLS_PAD = 128           # lane-dense padding for the combined cls+fc matmul
VMEM_LIMIT = 32 * 1024 * 1024   # safe on v5e/v6e/v7x; per-step usage is a few MiB


def _round_up(x, m):
    return (x + m - 1) // m * m


# --------------------------------------------------------------------------
# Fused backbone + classifier + (avgpool/fc folded in) kernel
# --------------------------------------------------------------------------

def _fused_kernel(x_ref, bbw_ref, bbb_ref, cw_ref, cb_ref,
                  logits_ref, ef2_ref, col_acc, *, tm, valid_rows, mask_rows):
    t = pl.program_id(1)
    n_t = pl.num_programs(1)

    x = x_ref[0]                                            # (tm, Cp) f32

    # ---- synthetic backbone: strided 1x1 conv (Cp -> 2048) + ReLU (MXU) ----
    feat = jnp.dot(x, bbw_ref[...],
                   preferred_element_type=jnp.float32) + bbb_ref[...]
    feat = jnp.maximum(feat, 0.0)                           # (tm, 2048) f32

    # ---- combined head: 1x1 conv classes + fc column, bf16 weights on MXU ----
    logits = jnp.dot(feat.astype(jnp.bfloat16), cw_ref[...],
                     preferred_element_type=jnp.float32) + cb_ref[...]   # (tm, CLS_PAD)

    # store only the real class rows, transposed so the pixel axis is lane-dense
    logits_ref[0] = logits.T[:NUM_CLASSES, :].astype(logits_ref.dtype)   # (ncls, tm)

    # ---- avgpool+fc accumulator: column sums of the same matmul output ----
    @pl.when(t == 0)
    def _():
        col_acc[...] = jnp.zeros_like(col_acc)

    if mask_rows:
        row = t * tm + jax.lax.broadcasted_iota(jnp.int32, (tm, 1), 0)
        contrib = jnp.where(row < valid_rows, logits, 0.0)
    else:
        contrib = logits
    col_acc[...] += jnp.sum(contrib, axis=0, keepdims=True)

    # ---- finalize: mean over valid pixels (fc bias added in the wrapper) ----
    @pl.when(t == n_t - 1)
    def _():
        ef2_ref[0] = (col_acc[...] * (1.0 / valid_rows)).astype(ef2_ref.dtype)


def fused_backbone_heads(xrows, bb_w, bb_b, cw_pad, cb_pad, *, tm, valid_rows):
    """xrows: (N, P_pad, Cp).  Returns (logits: (N, ncls, P_pad), ef2: (N, 1, CLS_PAD))."""
    N, P_pad, Cp = xrows.shape
    n_tiles = P_pad // tm

    kern = functools.partial(_fused_kernel, tm=tm, valid_rows=valid_rows,
                             mask_rows=(P_pad != valid_rows))

    grid_spec = pltpu.PrefetchScalarGridSpec(
        num_scalar_prefetch=0,
        grid=(N, n_tiles),
        in_specs=[
            pl.BlockSpec((1, tm, Cp), lambda n, t: (n, t, 0)),
            pl.BlockSpec((Cp, FEAT_CH), lambda n, t: (0, 0)),
            pl.BlockSpec((1, FEAT_CH), lambda n, t: (0, 0)),
            pl.BlockSpec((FEAT_CH, CLS_PAD), lambda n, t: (0, 0)),
            pl.BlockSpec((1, CLS_PAD), lambda n, t: (0, 0)),
        ],
        out_specs=[
            pl.BlockSpec((1, NUM_CLASSES, tm), lambda n, t: (n, 0, t)),
            pl.BlockSpec((1, 1, CLS_PAD), lambda n, t: (n, 0, 0)),
        ],
        scratch_shapes=[pltpu.VMEM((1, CLS_PAD), jnp.float32)],
    )

    return pl.pallas_call(
        kern,
        out_shape=(jax.ShapeDtypeStruct((N, NUM_CLASSES, P_pad), xrows.dtype),
                   jax.ShapeDtypeStruct((N, 1, CLS_PAD), xrows.dtype)),
        grid_spec=grid_spec,
        compiler_params=pltpu.CompilerParams(
            dimension_semantics=("parallel", "arbitrary"),
            vmem_limit_bytes=VMEM_LIMIT),
    )(xrows, bb_w, bb_b, cw_pad, cb_pad)


# --------------------------------------------------------------------------
# Bilinear upsample kernel (separable resize, batched stage-1 matmul)
# --------------------------------------------------------------------------

def _bilinear_kernel(x_ref, wh_ref, wwt_ref, o_ref, *, bt, hin):
    # stage 1: one batched MXU matmul over all bt images in the tile
    t1 = jnp.dot(x_ref[...], wwt_ref[...],
                 preferred_element_type=jnp.float32)        # (bt*hin, Wpad)
    wh = wh_ref[...]                                        # (Hout, hin)
    for b in range(bt):                                     # bt is small (VMEM-budgeted)
        o_ref[b] = jnp.dot(wh, t1[b * hin:(b + 1) * hin, :],
                           preferred_element_type=jnp.float32).astype(o_ref.dtype)


def bilinear_upsample(x2d, wh, wwt_pad, *, batch, hin):
    """x2d: (batch*hin, Win) rows; wh: (Hout, hin); wwt_pad: (Win, Wpad).

    Returns (batch, Hout, Wpad)."""
    _, Win = x2d.shape
    Hout = wh.shape[0]
    Wpad = wwt_pad.shape[1]

    # VMEM-budgeted batch tile: double-buffered in/out + stage-1 temp, and keep
    # at least 2 grid steps so both v7x TensorCores get work (megacore on v6e).
    per_img = 4 * (2 * hin * Win + 2 * Hout * Wpad + hin * Wpad)
    budget = 8 * 1024 * 1024
    bt = 1
    for d in range(1, batch + 1):
        if batch % d == 0 and d * per_img <= budget and (batch // d >= 2 or batch == 1):
            bt = d

    kern = functools.partial(_bilinear_kernel, bt=bt, hin=hin)
    return pl.pallas_call(
        kern,
        out_shape=jax.ShapeDtypeStruct((batch, Hout, Wpad), x2d.dtype),
        grid_spec=pltpu.PrefetchScalarGridSpec(
            num_scalar_prefetch=0,
            grid=(batch // bt,),
            in_specs=[
                pl.BlockSpec((bt * hin, Win), lambda b: (b, 0)),
                pl.BlockSpec((Hout, hin), lambda b: (0, 0)),
                pl.BlockSpec((Win, Wpad), lambda b: (0, 0)),
            ],
            out_specs=pl.BlockSpec((bt, Hout, Wpad), lambda b: (b, 0, 0)),
        ),
        compiler_params=pltpu.CompilerParams(
            dimension_semantics=("parallel",),
            vmem_limit_bytes=VMEM_LIMIT),
    )(x2d, wh, wwt_pad)


# --------------------------------------------------------------------------
# Host-side helpers (memoized bilinear matrices, params, forward)
# --------------------------------------------------------------------------

@functools.lru_cache(maxsize=None)
def _bilinear_matrix_np(out_size, in_size):
    """Row-stochastic resize matrix matching F.interpolate(mode='bilinear',
    align_corners=False): src = (dst + 0.5) * (in/out) - 0.5, clamped."""
    scale = in_size / out_size
    dst = np.arange(out_size, dtype=np.float64)
    src = np.clip((dst + 0.5) * scale - 0.5, 0.0, None)
    i0 = np.minimum(np.floor(src).astype(np.int64), in_size - 1)
    i1 = np.minimum(i0 + 1, in_size - 1)
    frac = src - i0
    w = np.zeros((out_size, in_size), dtype=np.float64)
    w[np.arange(out_size), i0] += 1.0 - frac
    w[np.arange(out_size), i1] += frac
    return w.astype(np.float32)


def bilinear_matrix(out_size, in_size):
    return jnp.asarray(_bilinear_matrix_np(out_size, in_size))


@functools.lru_cache(maxsize=None)
def _wh_padded_np(out_size, in_size, pad_to):
    w = np.zeros((out_size, pad_to), dtype=np.float32)
    w[:, :in_size] = _bilinear_matrix_np(out_size, in_size)
    return w


def bilinear_wh_padded(out_size, in_size, pad_to):
    return jnp.asarray(_wh_padded_np(out_size, in_size, pad_to))


@functools.lru_cache(maxsize=None)
def _wwt_padded_np(out_size, in_size, pad_to):
    wt = np.zeros((in_size, pad_to), dtype=np.float32)
    wt[:, :out_size] = _bilinear_matrix_np(out_size, in_size).T
    return wt


def bilinear_wwt_padded(out_size, in_size, pad_to):
    return jnp.asarray(_wwt_padded_np(out_size, in_size, pad_to))


def init_params(key, in_ch):
    ks = jax.random.split(key, 6)
    return {
        # synthetic backbone: strided 1x1 conv (in_ch -> 2048) + ReLU
        "bb_w": jax.random.normal(ks[0], (in_ch, FEAT_CH), jnp.float32) * 0.05,
        "bb_b": jax.random.normal(ks[1], (1, FEAT_CH), jnp.float32) * 0.05,
        # synthetic classifier head: 1x1 conv (2048 -> NUM_CLASSES)
        "cls_w": jax.random.normal(ks[2], (FEAT_CH, NUM_CLASSES), jnp.float32) * 0.02,
        "cls_b": jax.random.normal(ks[3], (1, NUM_CLASSES), jnp.float32) * 0.02,
        # nn.Linear(2048, 1)
        "fc_w": jax.random.normal(ks[4], (FEAT_CH, 1), jnp.float32) * 0.02,
        "fc_b": jax.random.normal(ks[5], (1, 1), jnp.float32) * 0.02,
    }


def deeplabv3_multi_forward(x, params):
    """x: (N, C, H, W) float32 -> (y: (N, NUM_CLASSES, H, W), ef2: (N, 1))."""
    N, C, H, W = x.shape

    # ---- synthetic backbone spatial reduction + pixel-row layout ----
    xs = x[:, :, ::STRIDE, ::STRIDE]                        # (N, C, Hf, Wf)
    Hf, Wf = xs.shape[2], xs.shape[3]
    P = Hf * Wf
    xrows = jnp.transpose(xs, (0, 2, 3, 1)).reshape(N, P, C)

    # pad the channel (K) dim to a sublane multiple for the MXU backbone matmul
    Cp = _round_up(C, 8)
    if Cp != C:
        xrows = jnp.pad(xrows, ((0, 0), (0, 0), (0, Cp - C)))
    bb_w = params["bb_w"]
    if Cp != C:
        bb_w = jnp.pad(bb_w, ((0, Cp - C), (0, 0)))

    # pixel-row tile: 512 (multiple of 256 for the MXU M dim), or the whole map
    if P >= 512:
        tm = 512
    else:
        tm = _round_up(P, 8)
    P_pad = _round_up(P, tm)
    if P_pad != P:
        xrows = jnp.pad(xrows, ((0, 0), (0, P_pad - P), (0, 0)))

    # combined classifier(+fc) weight, lane-padded to 128, stored as bf16
    cw = jnp.zeros((FEAT_CH, CLS_PAD), jnp.float32)
    cw = cw.at[:, :NUM_CLASSES].set(params["cls_w"])
    cw = cw.at[:, FC_COL:FC_COL + 1].set(params["fc_w"])
    cw_pad = cw.astype(jnp.bfloat16)
    cb_pad = jnp.zeros((1, CLS_PAD), jnp.float32).at[:, :NUM_CLASSES].set(params["cls_b"])

    logits_nc, ef2_pad = fused_backbone_heads(
        xrows, bb_w, params["bb_b"], cw_pad, cb_pad, tm=tm, valid_rows=P)

    # avgpool + fc head (fc bias added here; mean already applied in-kernel)
    ef2 = ef2_pad[:, 0, FC_COL:FC_COL + 1] + params["fc_b"][0]      # (N, 1)

    # ---- F.interpolate(size=(H, W), mode='bilinear', align_corners=False) ----
    lg = logits_nc[:, :, :P].reshape(N * NUM_CLASSES, Hf, Wf)
    Hf_pad = _round_up(Hf, 8)
    if Hf_pad != Hf:
        lg = jnp.pad(lg, ((0, 0), (0, Hf_pad - Hf), (0, 0)))
    lg2d = lg.reshape(N * NUM_CLASSES * Hf_pad, Wf)

    Wpad = _round_up(W, LANE)
    wh = bilinear_wh_padded(H, Hf, Hf_pad)                  # (H, Hf_pad), zero tail cols
    wwt = bilinear_wwt_padded(W, Wf, Wpad)                  # (Wf, Wpad)
    y_pad = bilinear_upsample(lg2d, wh, wwt,
                              batch=N * NUM_CLASSES, hin=Hf_pad)     # (N*ncls, H, Wpad)
    y = y_pad[:, :, :W].reshape(N, NUM_CLASSES, H, W)
    return y, ef2


def reference_forward(x, params):
    """Pure-JAX reference for a numerical sanity check."""
    N, C, H, W = x.shape
    xs = jnp.transpose(x[:, :, ::STRIDE, ::STRIDE], (0, 2, 3, 1))
    feat = jax.nn.relu(xs @ params["bb_w"] + params["bb_b"][0])
    logits = feat @ params["cls_w"] + params["cls_b"][0]
    pooled = jnp.mean(feat, axis=(1, 2))
    ef2 = pooled @ params["fc_w"] + params["fc_b"][0]
    wh = bilinear_matrix(H, feat.shape[1])
    ww = bilinear_matrix(W, feat.shape[2])
    lg = jnp.transpose(logits, (0, 3, 1, 2))                # (N, ncls, Hf, Wf)
    y = jnp.einsum("hi,ncij,wj->nchw", wh, lg, ww)
    return y, ef2


if __name__ == "__main__":
    key = jax.random.PRNGKey(0)
    k_x, k_p = jax.random.split(key)

    N, C, H, W = 2, 4, 16, 16
    x = jax.random.normal(k_x, (N, C, H, W), jnp.float32)
    params = init_params(k_p, C)

    fwd = jax.jit(deeplabv3_multi_forward)
    y, ef2 = fwd(x, params)
    jax.block_until_ready((y, ef2))

    assert y.shape == (N, NUM_CLASSES, H, W), y.shape
    assert ef2.shape == (N, 1), ef2.shape

    y_ref, ef2_ref = reference_forward(x, params)
    jax.block_until_ready((y_ref, ef2_ref))
    np.testing.assert_allclose(np.asarray(y), np.asarray(y_ref),
                               rtol=1e-2, atol=1e-2)
    np.testing.assert_allclose(np.asarray(ef2), np.asarray(ef2_ref),
                               rtol=1e-2, atol=1e-2)

    print("KERNEL_OK")
</pallas_src>

<mosaic_0001>
module attributes {stable_mosaic.version = 11 : i64} {
  func.func @_fused_kernel(%arg0: i32, %arg1: i32, %arg2: memref<1x16x8xf32, #tpu.memory_space<vmem>>, %arg3: memref<8x2048xf32, #tpu.memory_space<vmem>>, %arg4: memref<1x2048xf32, #tpu.memory_space<vmem>>, %arg5: memref<2048x128xbf16, #tpu.memory_space<vmem>>, %arg6: memref<1x128xf32, #tpu.memory_space<vmem>>, %arg7: memref<1x1x16xf32, #tpu.memory_space<vmem>>, %arg8: memref<1x1x128xf32, #tpu.memory_space<vmem>>, %arg9: memref<1x128xf32, #tpu.memory_space<vmem>>) attributes {dimension_semantics = [#tpu.dimension_semantics<parallel>, #tpu.dimension_semantics<arbitrary>], iteration_bounds = array<i64: 2, 1>, scalar_prefetch = 0 : i64, scratch_operands = 1 : i64, tpu.core_type = #tpu.core_type<tc>, window_params = [{transform_indices = @transform_0, window_bounds = array<i64: 1, 16, 8>}, {pipeline_mode = #tpu.pipeline_mode<synchronous>, transform_indices = @transform_1, window_bounds = array<i64: 8, 2048>}, {pipeline_mode = #tpu.pipeline_mode<synchronous>, transform_indices = @transform_2, window_bounds = array<i64: 1, 2048>}, {pipeline_mode = #tpu.pipeline_mode<synchronous>, transform_indices = @transform_3, window_bounds = array<i64: 2048, 128>}, {pipeline_mode = #tpu.pipeline_mode<synchronous>, transform_indices = @transform_4, window_bounds = array<i64: 1, 128>}, {transform_indices = @transform_5, window_bounds = array<i64: 1, 1, 16>}, {transform_indices = @transform_6, window_bounds = array<i64: 1, 1, 128>}]} {
    %c0 = arith.constant 0 : index
    %c0_0 = arith.constant 0 : index
    %c0_1 = arith.constant 0 : index
    %0 = vector.load %arg2[%c0, %c0_0, %c0_1] : memref<1x16x8xf32, #tpu.memory_space<vmem>>, vector<1x16x8xf32>
    %1 = vector.shape_cast %0 : vector<1x16x8xf32> to vector<16x8xf32>
    %c0_2 = arith.constant 0 : index
    %c0_3 = arith.constant 0 : index
    %2 = vector.load %arg3[%c0_2, %c0_3] : memref<8x2048xf32, #tpu.memory_space<vmem>>, vector<8x2048xf32>
    %cst = arith.constant dense<0.000000e+00> : vector<16x2048xf32>
    %3 = tpu.matmul %1, %2, %cst {dimension_numbers = #tpu.dot_dimension_numbers<[1], [0], [0], [1], [0, 0, 1, 1], [], []>} : vector<16x8xf32>, vector<8x2048xf32>, vector<16x2048xf32> -> vector<16x2048xf32>
    %c0_4 = arith.constant 0 : index
    %c0_5 = arith.constant 0 : index
    %4 = vector.load %arg4[%c0_4, %c0_5] : memref<1x2048xf32, #tpu.memory_space<vmem>>, vector<1x2048xf32>
    %5 = vector.broadcast %4 : vector<1x2048xf32> to vector<16x2048xf32>
    %6 = arith.addf %3, %5 : vector<16x2048xf32>
    %cst_6 = arith.constant 0.000000e+00 : f32
    %7 = vector.broadcast %cst_6 : f32 to vector<16x2048xf32>
    %8 = arith.maximumf %6, %7 : vector<16x2048xf32>
    %9 = arith.truncf %8 : vector<16x2048xf32> to vector<16x2048xbf16>
    %c0_7 = arith.constant 0 : index
    %c0_8 = arith.constant 0 : index
    %10 = vector.load %arg5[%c0_7, %c0_8] : memref<2048x128xbf16, #tpu.memory_space<vmem>>, vector<2048x128xbf16>
    %cst_9 = arith.constant dense<0.000000e+00> : vector<16x128xf32>
    %11 = tpu.matmul %9, %10, %cst_9 {dimension_numbers = #tpu.dot_dimension_numbers<[1], [0], [0], [1], [0, 0, 1, 1], [], []>} : vector<16x2048xbf16>, vector<2048x128xbf16>, vector<16x128xf32> -> vector<16x128xf32>
    %c0_10 = arith.constant 0 : index
    %c0_11 = arith.constant 0 : index
    %12 = vector.load %arg6[%c0_10, %c0_11] : memref<1x128xf32, #tpu.memory_space<vmem>>, vector<1x128xf32>
    %13 = vector.broadcast %12 : vector<1x128xf32> to vector<16x128xf32>
    %14 = arith.addf %11, %13 : vector<16x128xf32>
    %15 = tpu.transpose %14, [1, 0] : vector<16x128xf32> -> vector<128x16xf32>
    %16 = vector.extract_strided_slice %15 {offsets = [0, 0], sizes = [1, 16], strides = [1, 1]} : vector<128x16xf32> to vector<1x16xf32>
    %c0_12 = arith.constant 0 : index
    %c0_13 = arith.constant 0 : index
    %c0_14 = arith.constant 0 : index
    %17 = vector.load %arg7[%c0_12, %c0_13, %c0_14] : memref<1x1x16xf32, #tpu.memory_space<vmem>>, vector<1x1x16xf32>
    %18 = vector.shape_cast %17 : vector<1x1x16xf32> to vector<1x16xf32>
    %19 = vector.shape_cast %16 : vector<1x16xf32> to vector<1x1x16xf32>
    tpu.vector_store %arg7[%c0_12, %c0_13, %c0_14], %19 {strides = array<i32>} : memref<1x1x16xf32, #tpu.memory_space<vmem>>, vector<1x1x16xf32>,
    %c0_i32 = arith.constant 0 : i32
    %20 = arith.cmpi eq, %arg1, %c0_i32 : i32
    %21 = arith.extui %20 : i1 to i32
    %c0_i32_15 = arith.constant 0 : i32
    %22 = arith.cmpi ne, %21, %c0_i32_15 : i32
    scf.if %22 {
      %cst_23 = arith.constant 0.000000e+00 : f32
      %31 = vector.broadcast %cst_23 : f32 to vector<1x128xf32>
      %c0_24 = arith.constant 0 : index
      %c0_25 = arith.constant 0 : index
      %32 = vector.load %arg9[%c0_24, %c0_25] : memref<1x128xf32, #tpu.memory_space<vmem>>, vector<1x128xf32>
      tpu.vector_store %arg9[%c0_24, %c0_25], %31 {strides = array<i32>} : memref<1x128xf32, #tpu.memory_space<vmem>>, vector<1x128xf32>,
    } else {
    }
    %c0_16 = arith.constant 0 : index
    %c0_17 = arith.constant 0 : index
    %23 = vector.load %arg9[%c0_16, %c0_17] : memref<1x128xf32, #tpu.memory_space<vmem>>, vector<1x128xf32>
    %cst_18 = arith.constant dense<0.000000e+00> : vector<128xf32>
    %24 = vector.multi_reduction <add>, %14, %cst_18 [0] : vector<16x128xf32> to vector<128xf32>
    %25 = vector.shape_cast %24 : vector<128xf32> to vector<1x128xf32>
    %26 = arith.addf %23, %25 : vector<1x128xf32>
    %c0_19 = arith.constant 0 : index
    %c0_20 = arith.constant 0 : index
    %27 = vector.load %arg9[%c0_19, %c0_20] : memref<1x128xf32, #tpu.memory_space<vmem>>, vector<1x128xf32>
    tpu.vector_store %arg9[%c0_19, %c0_20], %26 {strides = array<i32>} : memref<1x128xf32, #tpu.memory_space<vmem>>, vector<1x128xf32>,
    %c0_i32_21 = arith.constant 0 : i32
    %28 = arith.cmpi eq, %arg1, %c0_i32_21 : i32
    %29 = arith.extui %28 : i1 to i32
    %c0_i32_22 = arith.constant 0 : i32
    %30 = arith.cmpi ne, %29, %c0_i32_22 : i32
    scf.if %30 {
      %c0_23 = arith.constant 0 : index
      %c0_24 = arith.constant 0 : index
      %31 = vector.load %arg9[%c0_23, %c0_24] : memref<1x128xf32, #tpu.memory_space<vmem>>, vector<1x128xf32>
      %cst_25 = arith.constant 6.250000e-02 : f32
      %32 = vector.broadcast %cst_25 : f32 to vector<1x128xf32>
      %33 = arith.mulf %31, %32 : vector<1x128xf32>
      %c0_26 = arith.constant 0 : index
      %c0_27 = arith.constant 0 : index
      %c0_28 = arith.constant 0 : index
      %34 = vector.load %arg8[%c0_26, %c0_27, %c0_28] : memref<1x1x128xf32, #tpu.memory_space<vmem>>, vector<1x1x128xf32>
      %35 = vector.shape_cast %34 : vector<1x1x128xf32> to vector<1x128xf32>
      %36 = vector.shape_cast %33 : vector<1x128xf32> to vector<1x1x128xf32>
      tpu.vector_store %arg8[%c0_26, %c0_27, %c0_28], %36 {strides = array<i32>} : memref<1x1x128xf32, #tpu.memory_space<vmem>>, vector<1x1x128xf32>,
    } else {
    }
    return
  }
  func.func @transform_0(%arg0: i32, %arg1: i32) -> (i32, i32, i32) {
    %c0_i32 = arith.constant 0 : i32
    %c0_i32_0 = arith.constant 0 : i32
    return %arg0, %arg1, %c0_i32 : i32, i32, i32
  }
  func.func @transform_1(%arg0: i32, %arg1: i32) -> (i32, i32) {
    %c0_i32 = arith.constant 0 : i32
    %c0_i32_0 = arith.constant 0 : i32
    %c0_i32_1 = arith.constant 0 : i32
    return %c0_i32, %c0_i32_0 : i32, i32
  }
  func.func @transform_2(%arg0: i32, %arg1: i32) -> (i32, i32) {
    %c0_i32 = arith.constant 0 : i32
    %c0_i32_0 = arith.constant 0 : i32
    %c0_i32_1 = arith.constant 0 : i32
    return %c0_i32, %c0_i32_0 : i32, i32
  }
  func.func @transform_3(%arg0: i32, %arg1: i32) -> (i32, i32) {
    %c0_i32 = arith.constant 0 : i32
    %c0_i32_0 = arith.constant 0 : i32
    %c0_i32_1 = arith.constant 0 : i32
    return %c0_i32, %c0_i32_0 : i32, i32
  }
  func.func @transform_4(%arg0: i32, %arg1: i32) -> (i32, i32) {
    %c0_i32 = arith.constant 0 : i32
    %c0_i32_0 = arith.constant 0 : i32
    %c0_i32_1 = arith.constant 0 : i32
    return %c0_i32, %c0_i32_0 : i32, i32
  }
  func.func @transform_5(%arg0: i32, %arg1: i32) -> (i32, i32, i32) {
    %c0_i32 = arith.constant 0 : i32
    %c0_i32_0 = arith.constant 0 : i32
    return %arg0, %c0_i32, %arg1 : i32, i32, i32
  }
  func.func @transform_6(%arg0: i32, %arg1: i32) -> (i32, i32, i32) {
    %c0_i32 = arith.constant 0 : i32
    %c0_i32_0 = arith.constant 0 : i32
    %c0_i32_1 = arith.constant 0 : i32
    return %arg0, %c0_i32, %c0_i32_0 : i32, i32, i32
  }
}

module attributes {stable_mosaic.version = 11 : i64} {
  func.func @_bilinear_kernel(%arg0: i32, %arg1: memref<8x4xf32, #tpu.memory_space<vmem>>, %arg2: memref<16x8xf32, #tpu.memory_space<vmem>>, %arg3: memref<4x128xf32, #tpu.memory_space<vmem>>, %arg4: memref<1x16x128xf32, #tpu.memory_space<vmem>>) attributes {dimension_semantics = [#tpu.dimension_semantics<parallel>], iteration_bounds = array<i64: 2>, scalar_prefetch = 0 : i64, scratch_operands = 0 : i64, tpu.core_type = #tpu.core_type<tc>, window_params = [{transform_indices = @transform_0, window_bounds = array<i64: 8, 4>}, {pipeline_mode = #tpu.pipeline_mode<synchronous>, transform_indices = @transform_1, window_bounds = array<i64: 16, 8>}, {pipeline_mode = #tpu.pipeline_mode<synchronous>, transform_indices = @transform_2, window_bounds = array<i64: 4, 128>}, {transform_indices = @transform_3, window_bounds = array<i64: 1, 16, 128>}]} {
    %c0 = arith.constant 0 : index
    %c0_0 = arith.constant 0 : index
    %0 = vector.load %arg1[%c0, %c0_0] : memref<8x4xf32, #tpu.memory_space<vmem>>, vector<8x4xf32>
    %c0_1 = arith.constant 0 : index
    %c0_2 = arith.constant 0 : index
    %1 = vector.load %arg3[%c0_1, %c0_2] : memref<4x128xf32, #tpu.memory_space<vmem>>, vector<4x128xf32>
    %cst = arith.constant dense<0.000000e+00> : vector<8x128xf32>
    %2 = tpu.matmul %0, %1, %cst {dimension_numbers = #tpu.dot_dimension_numbers<[1], [0], [0], [1], [0, 0, 1, 1], [], []>} : vector<8x4xf32>, vector<4x128xf32>, vector<8x128xf32> -> vector<8x128xf32>
    %c0_3 = arith.constant 0 : index
    %c0_4 = arith.constant 0 : index
    %3 = vector.load %arg2[%c0_3, %c0_4] : memref<16x8xf32, #tpu.memory_space<vmem>>, vector<16x8xf32>
    %cst_5 = arith.constant dense<0.000000e+00> : vector<16x128xf32>
    %4 = tpu.matmul %3, %2, %cst_5 {dimension_numbers = #tpu.dot_dimension_numbers<[1], [0], [0], [1], [0, 0, 1, 1], [], []>} : vector<16x8xf32>, vector<8x128xf32>, vector<16x128xf32> -> vector<16x128xf32>
    %c0_6 = arith.constant 0 : index
    %c0_7 = arith.constant 0 : index
    %c0_8 = arith.constant 0 : index
    %5 = vector.load %arg4[%c0_6, %c0_7, %c0_8] : memref<1x16x128xf32, #tpu.memory_space<vmem>>, vector<1x16x128xf32>
    %6 = vector.shape_cast %5 : vector<1x16x128xf32> to vector<16x128xf32>
    %7 = vector.shape_cast %4 : vector<16x128xf32> to vector<1x16x128xf32>
    tpu.vector_store %arg4[%c0_6, %c0_7, %c0_8], %7 {strides = array<i32>} : memref<1x16x128xf32, #tpu.memory_space<vmem>>, vector<1x16x128xf32>,
    return
  }
  func.func @transform_0(%arg0: i32) -> (i32, i32) {
    %c0_i32 = arith.constant 0 : i32
    %c0_i32_0 = arith.constant 0 : i32
    return %arg0, %c0_i32 : i32, i32
  }
  func.func @transform_1(%arg0: i32) -> (i32, i32) {
    %c0_i32 = arith.constant 0 : i32
    %c0_i32_0 = arith.constant 0 : i32
    %c0_i32_1 = arith.constant 0 : i32
    return %c0_i32, %c0_i32_0 : i32, i32
  }
  func.func @transform_2(%arg0: i32) -> (i32, i32) {
    %c0_i32 = arith.constant 0 : i32
    %c0_i32_0 = arith.constant 0 : i32
    %c0_i32_1 = arith.constant 0 : i32
    return %c0_i32, %c0_i32_0 : i32, i32
  }
  func.func @transform_3(%arg0: i32) -> (i32, i32, i32) {
    %c0_i32 = arith.constant 0 : i32
    %c0_i32_0 = arith.constant 0 : i32
    %c0_i32_1 = arith.constant 0 : i32
    return %arg0, %c0_i32, %c0_i32_0 : i32, i32, i32
  }
}

</mosaic_0001>

<llo_original>
// kernel: deeplabv3_multi_forward.3
$region0: #{deeplabv3_multi_forward.3}
  #allocation0 [shape = 'u32[]', space=smem, size = 0x4, offset = 0x4, fixed_abs, tag = 'smem constant byte address 0x4 - core index']
  #allocation1 [shape = 'u32[144,128]{1,0:T(1,128)}', space=vmem, size = 0x12000, scoped, tag = 'internal scratch']
  %s0 = inlined_call_operand.vmem [shape: f32[16,4], index: 0, kind: input, shape index: {}]
  %s1 = inlined_call_operand.vmem [shape: f32[16,8], index: 1, kind: input, shape index: {}]
  %s2 = inlined_call_operand.vmem [shape: f32[4,128], index: 2, kind: input, shape index: {}]
  %s3 = inlined_call_operand.vmem [shape: f32[2,16,128], index: 3, kind: output, shape index: {}]
  %s4 = sld [smem:[#allocation0]]
  $region45: #{deeplabv3_multi_forward.3} parent=0
    _
  %s6 = ssub.s32 1, %s4
  %s7 = scalar_select 0, %s6, %s4
  loop: start=0, step=1, limit=4
  $region2: #{deeplabv3_multi_forward.3} parent=0 // loop_pre_header
    _
  $region3: #{deeplabv3_multi_forward.3} parent=0 // loop_header
    %s9 = sphi 0, %s13
    %p10 = scmp.ge.s32.totalorder %s9, 4
    %s19 = sphi 0, %s21
    %s22 = sphi 0, %s19
    %s23 = sphi 0, %s22
    %s39 = sphi 0, %s23
    %s43 = sphi 0, %s43
    %s45 = sphi 0, %s43
    %s46 = sphi 0, %s45
    %s60 = sphi 0, %s46
    %s64 = sphi 0, %s64
    %s66 = sphi 0, %s64
    %s67 = sphi 0, %s66
    %s81 = sphi 0, %s67
    %s87 = sphi 0, %s89
    %s90 = sphi 0, %s87
    %s91 = sphi 0, %s90
    %s107 = sphi 0, %s91
  $region4: #{deeplabv3_multi_forward.3} parent=0 // loop_header_branch
    %12 = sbr.rel (%p10) target = $region8
  $region5: #{deeplabv3_multi_forward.3} parent=0 // loop_body
    %s14 = ssub.s32 %s9, 1
    %s15 = ssub.s32 %s9, 2
    %s16 = sadd.s32 %s9, 1
    %s17 = ssub.s32 %s9, %s16
    %p18 = scmp.eq.s32.totalorder %s17, 0
    %s20 = sadd.s32 %s19, 1
    %s21 = scalar_select %p18, %s19, %s20
    %p24 = pneg %p18
    %p25 = scmp.eq.s32.totalorder %s9, 1
    %p26 = por %p24, %p25
    %p27 = scmp.ne.s32.totalorder %s19, %s22
    %p28 = scmp.eq.s32.totalorder %s9, 0
    %p29 = por %p27, %p28
    %p30 = scmp.ne.s32.totalorder %s19, %s22
    %p31 = scmp.eq.s32.totalorder %s14, 1
    %p32 = por %p30, %p31
    %p33 = scmp.ne.s32.totalorder %s22, %s23
    %p34 = scmp.eq.s32.totalorder %s14, 0
    %p35 = por %p33, %p34
    %p36 = scmp.ne.s32.totalorder %s22, %s23
    %p37 = scmp.eq.s32.totalorder %s15, 1
    %p38 = por %p36, %p37
    %p40 = scmp.ne.s32.totalorder %s23, %s39
    %p41 = scmp.eq.s32.totalorder %s15, 0
    %p42 = por %p40, %p41
    %s44 = sadd.s32 %s43, 1
    %p47 = scmp.eq.s32.totalorder %s9, 1
    %p48 = scmp.ne.s32.totalorder %s43, %s45
    %p49 = scmp.eq.s32.totalorder %s9, 0
    %p50 = por %p48, %p49
    %p51 = scmp.ne.s32.totalorder %s43, %s45
    %p52 = scmp.eq.s32.totalorder %s14, 1
    %p53 = por %p51, %p52
    %p54 = scmp.ne.s32.totalorder %s45, %s46
    %p55 = scmp.eq.s32.totalorder %s14, 0
    %p56 = por %p54, %p55
    %p57 = scmp.ne.s32.totalorder %s45, %s46
    %p58 = scmp.eq.s32.totalorder %s15, 1
    %p59 = por %p57, %p58
    %p61 = scmp.ne.s32.totalorder %s46, %s60
    %p62 = scmp.eq.s32.totalorder %s15, 0
    %p63 = por %p61, %p62
    %s65 = sadd.s32 %s64, 1
    %p68 = scmp.eq.s32.totalorder %s9, 1
    %p69 = scmp.ne.s32.totalorder %s64, %s66
    %p70 = scmp.eq.s32.totalorder %s9, 0
    %p71 = por %p69, %p70
    %p72 = scmp.ne.s32.totalorder %s64, %s66
    %p73 = scmp.eq.s32.totalorder %s14, 1
    %p74 = por %p72, %p73
    %p75 = scmp.ne.s32.totalorder %s66, %s67
    %p76 = scmp.eq.s32.totalorder %s14, 0
    %p77 = por %p75, %p76
    %p78 = scmp.ne.s32.totalorder %s66, %s67
    %p79 = scmp.eq.s32.totalorder %s15, 1
    %p80 = por %p78, %p79
    %p82 = scmp.ne.s32.totalorder %s67, %s81
    %p83 = scmp.eq.s32.totalorder %s15, 0
    %p84 = por %p82, %p83
    %s85 = ssub.s32 %s9, %s16
    %p86 = scmp.eq.s32.totalorder %s85, 0
    %s88 = sadd.s32 %s87, 1
    %s89 = scalar_select %p86, %s87, %s88
    %p92 = pneg %p86
    %p93 = scmp.eq.s32.totalorder %s9, 1
    %p94 = por %p92, %p93
    %p95 = scmp.ne.s32.totalorder %s87, %s90
    %p96 = scmp.eq.s32.totalorder %s9, 0
    %p97 = por %p95, %p96
    %p98 = scmp.ne.s32.totalorder %s87, %s90
    %p99 = scmp.eq.s32.totalorder %s14, 1
    %p100 = por %p98, %p99
    %p101 = scmp.ne.s32.totalorder %s90, %s91
    %p102 = scmp.eq.s32.totalorder %s14, 0
    %p103 = por %p101, %p102
    %p104 = scmp.ne.s32.totalorder %s90, %s91
    %p105 = scmp.eq.s32.totalorder %s15, 1
    %p106 = por %p104, %p105
    %p108 = scmp.ne.s32.totalorder %s91, %s107
    %p109 = scmp.eq.s32.totalorder %s15, 0
    %p110 = por %p108, %p109
    %p111 = scmp.le.s32.totalorder 1, %s9
    %p112 = scmp.lt.s32.totalorder %s9, 3
    %p113 = pnand %p111, %p112
    %p114 = pneg %p113
    // Predicated region
    $region9: #{deeplabv3_multi_forward.3} parent=5 // pred_check
      _
    $region10: #{deeplabv3_multi_forward.3} parent=5 // pred_check_branch
      %116 = sbr.rel (%p113) target = $region12
    $region11: #{deeplabv3_multi_forward.3} parent=5 // pred_region
      %s117 = ssub.s32 %s9, 1
      // Predicated region
      $region13: #{deeplabv3_multi_forward.3} parent=11 // pred_check
        %p118 = pneg %p56
      $region14: #{deeplabv3_multi_forward.3} parent=11 // pred_check_branch
        %120 = sbr.rel (%p118) target = $region16
      $region15: #{deeplabv3_multi_forward.3} parent=11 // pred_region
        _
      $region16: #{deeplabv3_multi_forward.3} parent=11 // pred_fallthru
        _
      // Predicated region
      $region17: #{deeplabv3_multi_forward.3} parent=11 // pred_check
        %p121 = pneg %p77
      $region18: #{deeplabv3_multi_forward.3} parent=11 // pred_check_branch
        %123 = sbr.rel (%p121) target = $region20
      $region19: #{deeplabv3_multi_forward.3} parent=11 // pred_region
        _
      $region20: #{deeplabv3_multi_forward.3} parent=11 // pred_fallthru
        _
    $region12: #{deeplabv3_multi_forward.3} parent=5 // pred_fallthru
      _
    %p124 = scmp.lt.s32.totalorder %s9, 2
    // Predicated region
    $region21: #{deeplabv3_multi_forward.3} parent=5 // pred_check
      %p125 = pneg %p124
    $region22: #{deeplabv3_multi_forward.3} parent=5 // pred_check_branch
      %127 = sbr.rel (%p125) target = $region24
    $region23: #{deeplabv3_multi_forward.3} parent=5 // pred_region
      // Predicated region
      $region25: #{deeplabv3_multi_forward.3} parent=23 // pred_check
        %p128 = pneg %p29
      $region26: #{deeplabv3_multi_forward.3} parent=23 // pred_check_branch
        %130 = sbr.rel (%p128) target = $region28
      $region27: #{deeplabv3_multi_forward.3} parent=23 // pred_region
        %p131 = scmp.lt.s32.totalorder %s9, 1
        %s132 = scalar_select %p131, %s9, 1
        %s133 = smul.addr %s132, 8
        %s134 = scalar_lea.vmem %s0, %s133
      $region28: #{deeplabv3_multi_forward.3} parent=23 // pred_fallthru
        _
    $region24: #{deeplabv3_multi_forward.3} parent=5 // pred_fallthru
      _
    %p135 = scmp.le.s32.totalorder 1, %s9
    %p136 = scmp.lt.s32.totalorder %s9, 3
    %p137 = pnand %p135, %p136
    %p138 = pneg %p137
    // Predicated region
    $region29: #{deeplabv3_multi_forward.3} parent=5 // pred_check
      _
    $region30: #{deeplabv3_multi_forward.3} parent=5 // pred_check_branch
      %140 = sbr.rel (%p137) target = $region32
    $region31: #{deeplabv3_multi_forward.3} parent=5 // pred_region
      %s141 = ssub.s32 %s9, 1
      %p142 = scmp.lt.s32.totalorder %s14, 1
      %s143 = scalar_select %p142, %s14, 1
      %s144 = smul.addr %s143, 8
      %s145 = scalar_lea.vmem %s0, %s144
      %p146 = pneg %p35
      %p147 = pneg %p32
      %p148 = pneg %p56
      %p149 = pneg %p53
      %p150 = pneg %p77
      %p151 = pneg %p74
      %p152 = pneg %p103
      %p153 = pneg %p100
      %p154 = scmp.lt.s32.totalorder %s14, 1
      %s155 = scalar_select %p154, %s14, 1
      %s156 = smul.addr %s155, 2
      %s157 = smul.addr %s156, 8
      %s158 = scalar_lea.vmem %s3, %s157
      %p159 = scmp.lt.s32.totalorder %s14, 1
      %s160 = scalar_select %p159, %s14, 1
      %s161 = smul.addr %s160, 8
      %s162 = scalar_lea.vmem %s0, %s161
      %p163 = scmp.lt.s32.totalorder %s14, 1
      %s164 = scalar_select %p163, %s14, 1
      %s165 = smul.addr %s164, 2
      %s166 = smul.addr %s165, 8
      %s167 = scalar_lea.vmem %s3, %s166
      %v168 = vld [vmem:[%s162] sm:$0xff]
      %v169 = vld [vmem:[%s2] sm:$0xf]
      %vm170 = vcmask 31744
      %v172 = vsel %vm170, %v168, 0
      %vm174 = vcmask 1043456
      %v176 = vsel %vm174, %v169, 0
      %178 = vmatprep.subr.mxu0 0.0
      %179 = vmatpush1.msra.mxu0 %v176
      %180 = vmatprep.subr.mxu0 0.0
      %181 = vmatpush1.msra.mxu0 0.0
      %182 = vmatprep.subr.mxu0 0.0
      %183 = vmatpush1.msra.mxu0 0.0
      %184 = vmatprep.subr.mxu0 0.0
      %185 = vmatpush1.msra.mxu0 0.0
      %186 = vmatprep.subr.mxu0 0.0
      %187 = vmatpush1.msra.mxu0 0.0
      %188 = vmatprep.subr.mxu0 0.0
      %189 = vmatpush1.msra.mxu0 0.0
      %190 = vmatprep.subr.mxu0 0.0
      %191 = vmatpush1.msra.mxu0 0.0
      %192 = vmatprep.subr.mxu0 0.0
      %193 = vmatpush1.msra.mxu0 0.0
      %194 = vmatprep.subr.mxu0 0.0
      %195 = vmatpush1.msra.mxu0 0.0
      %196 = vmatprep.subr.mxu0 0.0
      %197 = vmatpush1.msra.mxu0 0.0
      %198 = vmatprep.subr.mxu0 0.0
      %199 = vmatpush1.msra.mxu0 0.0
      %200 = vmatprep.subr.mxu0 0.0
      %201 = vmatpush1.msra.mxu0 0.0
      %202 = vmatprep.subr.mxu0 0.0
      %203 = vmatpush1.msra.mxu0 0.0
      %204 = vmatprep.subr.mxu0 0.0
      %205 = vmatpush1.msra.mxu0 0.0
      %206 = vmatprep.subr.mxu0 0.0
      %207 = vmatpush1.msra.mxu0 0.0
      %208 = vmatprep.subr.mxu0 0.0
      %209 = vmatpush1.msra.mxu0 0.0
      %210 = vmatprep.subr.mxu0 0.0
      %211 = vmatpush1.msra.mxu0 0.0
      %212 = vmatprep.subr.mxu0 0.0
      %213 = vmatpush1.msra.mxu0 0.0
      %214 = vmatprep.subr.mxu0 0.0
      %215 = vmatpush1.msra.mxu0 0.0
      %216 = vmatprep.subr.mxu0 0.0
      %217 = vmatpush1.msra.mxu0 0.0
      %218 = vmatprep.subr.mxu0 0.0
      %219 = vmatpush1.msra.mxu0 0.0
      %220 = vmatprep.subr.mxu0 0.0
      %221 = vmatpush1.msra.mxu0 0.0
      %222 = vmatprep.subr.mxu0 0.0
      %223 = vmatpush1.msra.mxu0 0.0
      %224 = vmatprep.subr.mxu0 0.0
      %225 = vmatpush1.msra.mxu0 0.0
      %226 = vmatprep.subr.mxu0 0.0
      %227 = vmatpush1.msra.mxu0 0.0
      %228 = vmatprep.subr.mxu0 0.0
      %229 = vmatpush1.msra.mxu0 0.0
      %230 = vmatprep.subr.mxu0 0.0
      %231 = vmatpush1.msra.mxu0 0.0
      %232 = vmatprep.subr.mxu0 0.0
      %233 = vmatpush1.msra.mxu0 0.0
      %234 = vmatprep.subr.mxu0 0.0
      %235 = vmatpush1.msra.mxu0 0.0
      %236 = vmatprep.subr.mxu0 0.0
      %237 = vmatpush1.msra.mxu0 0.0
      %238 = vmatprep.subr.mxu0 0.0
      %239 = vmatpush1.msra.mxu0 0.0
      %240 = vmatprep.subr.mxu0 0.0
      %241 = vmatpush1.msra.mxu0 0.0
      %242 = vmatprep.mubr.f32.mxu0 0.0
      %243 = vmatmul.mubr.f32.gmra.mrb[0].mxu0 %v172
      %v244 = vpop.f32.mrb[0].mxu0
      %v245 = vadd.f32 0.0, %v244
      %v246 = vpop.f32.mrb[0].mxu0
      %247 = vdwg.mxu0
      %v248 = vld [vmem:[%s1] sm:$0xff]
      %v249 = vld [vmem:[%s1 + $0x8] sm:$0xff]
      %vm250 = vcmask 64512
      %v252 = vsel %vm250, %v248, 0
      %v255 = vsel %vm250, %v249, 0
      %257 = vmatprep.subr.mxu0 0.0
      %258 = vmatpush1.msra.mxu0 %v245
      %259 = vmatprep.subr.mxu0 0.0
      %260 = vmatpush1.msra.mxu0 0.0
      %261 = vmatprep.subr.mxu0 0.0
      %262 = vmatpush1.msra.mxu0 0.0
      %263 = vmatprep.subr.mxu0 0.0
      %264 = vmatpush1.msra.mxu0 0.0
      %265 = vmatprep.subr.mxu0 0.0
      %266 = vmatpush1.msra.mxu0 0.0
      %267 = vmatprep.subr.mxu0 0.0
      %268 = vmatpush1.msra.mxu0 0.0
      %269 = vmatprep.subr.mxu0 0.0
      %270 = vmatpush1.msra.mxu0 0.0
      %271 = vmatprep.subr.mxu0 0.0
      %272 = vmatpush1.msra.mxu0 0.0
      %273 = vmatprep.subr.mxu0 0.0
      %274 = vmatpush1.msra.mxu0 0.0
      %275 = vmatprep.subr.mxu0 0.0
      %276 = vmatpush1.msra.mxu0 0.0
      %277 = vmatprep.subr.mxu0 0.0
      %278 = vmatpush1.msra.mxu0 0.0
      %279 = vmatprep.subr.mxu0 0.0
      %280 = vmatpush1.msra.mxu0 0.0
      %281 = vmatprep.subr.mxu0 0.0
      %282 = vmatpush1.msra.mxu0 0.0
      %283 = vmatprep.subr.mxu0 0.0
      %284 = vmatpush1.msra.mxu0 0.0
      %285 = vmatprep.subr.mxu0 0.0
      %286 = vmatpush1.msra.mxu0 0.0
      %287 = vmatprep.subr.mxu0 0.0
      %288 = vmatpush1.msra.mxu0 0.0
      %289 = vmatprep.subr.mxu0 0.0
      %290 = vmatpush1.msra.mxu0 0.0
      %291 = vmatprep.subr.mxu0 0.0
      %292 = vmatpush1.msra.mxu0 0.0
      %293 = vmatprep.subr.mxu0 0.0
      %294 = vmatpush1.msra.mxu0 0.0
      %295 = vmatprep.subr.mxu0 0.0
      %296 = vmatpush1.msra.mxu0 0.0
      %297 = vmatprep.subr.mxu0 0.0
      %298 = vmatpush1.msra.mxu0 0.0
      %299 = vmatprep.subr.mxu0 0.0
      %300 = vmatpush1.msra.mxu0 0.0
      %301 = vmatprep.subr.mxu0 0.0
      %302 = vmatpush1.msra.mxu0 0.0
      %303 = vmatprep.subr.mxu0 0.0
      %304 = vmatpush1.msra.mxu0 0.0
      %305 = vmatprep.subr.mxu0 0.0
      %306 = vmatpush1.msra.mxu0 0.0
      %307 = vmatprep.subr.mxu0 0.0
      %308 = vmatpush1.msra.mxu0 0.0
      %309 = vmatprep.subr.mxu0 0.0
      %310 = vmatpush1.msra.mxu0 0.0
      %311 = vmatprep.subr.mxu0 0.0
      %312 = vmatpush1.msra.mxu0 0.0
      %313 = vmatprep.subr.mxu0 0.0
      %314 = vmatpush1.msra.mxu0 0.0
      %315 = vmatprep.subr.mxu0 0.0
      %316 = vmatpush1.msra.mxu0 0.0
      %317 = vmatprep.subr.mxu0 0.0
      %318 = vmatpush1.msra.mxu0 0.0
      %319 = vmatprep.subr.mxu0 0.0
      %320 = vmatpush1.msra.mxu0 0.0
      %321 = vmatprep.mubr.f32.mxu0 0.0
      %322 = vmatmul.mubr.f32.gmra.mrb[0].mxu0 %v252
      %v323 = vpop.f32.mrb[0].mxu0
      %v324 = vadd.f32 0.0, %v323
      %v325 = vpop.f32.mrb[0].mxu0
      %326 = vmatprep.mubr.f32.mxu0 0.0
      %327 = vmatmul.mubr.f32.gmra.mrb[0].mxu0 %v255
      %v328 = vpop.f32.mrb[0].mxu0
      %v329 = vadd.f32 0.0, %v328
      %v330 = vpop.f32.mrb[0].mxu0
      %331 = vdwg.mxu0
      %332 = vst [vmem:[%s167] sm:$0xff] %v324
      %333 = vst [vmem:[%s167 + $0x8] sm:$0xff] %v329
      %p334 = scmp.lt.s32.totalorder %s14, 1
      %s335 = scalar_select %p334, %s14, 1
      %s336 = smul.addr %s335, 2
      %s337 = smul.addr %s336, 8
      %s338 = scalar_lea.vmem %s3, %s337
      // Predicated region
      $region33: #{deeplabv3_multi_forward.3} parent=31 // pred_check
        %p339 = pneg %p100
      $region34: #{deeplabv3_multi_forward.3} parent=31 // pred_check_branch
        %341 = sbr.rel (%p339) target = $region36
      $region35: #{deeplabv3_multi_forward.3} parent=31 // pred_region
        _
      $region36: #{deeplabv3_multi_forward.3} parent=31 // pred_fallthru
        _
    $region32: #{deeplabv3_multi_forward.3} parent=5 // pred_fallthru
      _
    %p342 = scmp.le.s32.totalorder 2, %s9
    // Predicated region
    $region37: #{deeplabv3_multi_forward.3} parent=5 // pred_check
      %p343 = pneg %p342
    $region38: #{deeplabv3_multi_forward.3} parent=5 // pred_check_branch
      %345 = sbr.rel (%p343) target = $region40
    $region39: #{deeplabv3_multi_forward.3} parent=5 // pred_region
      %s346 = ssub.s32 %s9, 2
      // Predicated region
      $region41: #{deeplabv3_multi_forward.3} parent=39 // pred_check
        %p347 = pneg %p106
      $region42: #{deeplabv3_multi_forward.3} parent=39 // pred_check_branch
        %349 = sbr.rel (%p347) target = $region44
      $region43: #{deeplabv3_multi_forward.3} parent=39 // pred_region
        %p350 = scmp.lt.s32.totalorder %s15, 1
        %s351 = scalar_select %p350, %s15, 1
        %s352 = smul.addr %s351, 2
        %s353 = smul.addr %s352, 8
        %s354 = scalar_lea.vmem %s3, %s353
      $region44: #{deeplabv3_multi_forward.3} parent=39 // pred_fallthru
        _
    $region40: #{deeplabv3_multi_forward.3} parent=5 // pred_fallthru
      _
  $region6: #{deeplabv3_multi_forward.3} parent=0 // loop_footer
    %s13 = sadd.s32 1, %s9
  $region7: #{deeplabv3_multi_forward.3} parent=0 // loop_footer_branch
    %8 = sbr.rel target = $region3
  $region8: #{deeplabv3_multi_forward.3} parent=0 // loop_exit
    _

// kernel: deeplabv3_multi_forward.2
$region0: #{deeplabv3_multi_forward.2}
  #allocation0 [shape = 'u32[]', space=smem, size = 0x4, offset = 0x4, fixed_abs, tag = 'smem constant byte address 0x4 - core index']
  #allocation1 [shape = 'u32[144,128]{1,0:T(1,128)}', space=vmem, size = 0x12000, scoped, tag = 'internal scratch']
  #allocation2 [shape = 'f32[1,128]{1,0:T(1,128)}', space=vmem, size = 0x200, scoped, tag = 'scratch operand']
  %s0 = inlined_call_operand.vmem [shape: f32[2,16,8], index: 0, kind: input, shape index: {}]
  %s1 = inlined_call_operand.vmem [shape: f32[8,2048], index: 1, kind: input, shape index: {}]
  %s2 = inlined_call_operand.vmem [shape: f32[1,2048], index: 2, kind: input, shape index: {}]
  %s3 = inlined_call_operand.vmem [shape: bf16[2048,128], index: 3, kind: input, shape index: {}]
  %s4 = inlined_call_operand.vmem [shape: f32[1,128], index: 4, kind: input, shape index: {}]
  %s5 = inlined_call_operand.vmem [shape: f32[2,1,16], index: 5, kind: output, shape index: {0}]
  %s6 = inlined_call_operand.vmem [shape: f32[2,1,128], index: 6, kind: output, shape index: {1}]
  %7 = xla_tuple %s5, %s6
  %s8 = sld [smem:[#allocation0]]
  $region69: #{deeplabv3_multi_forward.2} parent=0
    _
  %s10 = ssub.s32 1, %s8
  %s11 = scalar_select 0, %s10, %s8
  loop: start=0, step=1, limit=4
  $region2: #{deeplabv3_multi_forward.2} parent=0 // loop_pre_header
    _
  $region3: #{deeplabv3_multi_forward.2} parent=0 // loop_header
    %s13 = sphi 0, %s17
    %p14 = scmp.ge.s32.totalorder %s13, 4
    %s20 = sphi 0, %s32
    %s21 = sphi 0, %s28
    %s22 = sphi 0, %s20
    %s23 = sphi 0, %s21
    %s24 = sphi 0, %s22
    %s25 = sphi 0, %s23
    %s37 = sphi 0, %s39
    %s40 = sphi 0, %s37
    %s41 = sphi 0, %s40
    %s57 = sphi 0, %s41
    %s61 = sphi 0, %s61
    %s63 = sphi 0, %s61
    %s64 = sphi 0, %s63
    %s78 = sphi 0, %s64
    %s82 = sphi 0, %s82
    %s84 = sphi 0, %s82
    %s85 = sphi 0, %s84
    %s99 = sphi 0, %s85
    %s103 = sphi 0, %s103
    %s105 = sphi 0, %s103
    %s106 = sphi 0, %s105
    %s120 = sphi 0, %s106
    %s124 = sphi 0, %s124
    %s126 = sphi 0, %s124
    %s127 = sphi 0, %s126
    %s141 = sphi 0, %s127
    %s149 = sphi 0, %s151
    %s152 = sphi 0, %s149
    %s153 = sphi 0, %s152
    %s169 = sphi 0, %s153
    %s175 = sphi 0, %s177
    %s178 = sphi 0, %s175
    %s179 = sphi 0, %s178
    %s195 = sphi 0, %s179
  $region4: #{deeplabv3_multi_forward.2} parent=0 // loop_header_branch
    %16 = sbr.rel (%p14) target = $region8
  $region5: #{deeplabv3_multi_forward.2} parent=0 // loop_body
    %s18 = ssub.s32 %s13, 1
    %s19 = ssub.s32 %s13, 2
    %s26 = sadd.s32 1, %s21
    %p27 = scmp.ge.s32.totalorder %s26, 1
    %s28 = scalar_select %p27, 0, %s26
    %s29 = sadd.s32 1, %s20
    %s30 = scalar_select %p27, %s29, %s20
    %p31 = scmp.ge.s32.totalorder %s30, 2
    %s32 = scalar_select %p31, 0, %s30
    %s33 = ssub.s32 %s20, %s32
    %s34 = ssub.s32 %s21, %s28
    %s35 = sor.u32 %s33, %s34
    %p36 = scmp.eq.s32.totalorder %s35, 0
    %s38 = sadd.s32 %s37, 1
    %s39 = scalar_select %p36, %s37, %s38
    %p42 = pneg %p36
    %p43 = scmp.eq.s32.totalorder %s13, 1
    %p44 = por %p42, %p43
    %p45 = scmp.ne.s32.totalorder %s37, %s40
    %p46 = scmp.eq.s32.totalorder %s13, 0
    %p47 = por %p45, %p46
    %p48 = scmp.ne.s32.totalorder %s37, %s40
    %p49 = scmp.eq.s32.totalorder %s18, 1
    %p50 = por %p48, %p49
    %p51 = scmp.ne.s32.totalorder %s40, %s41
    %p52 = scmp.eq.s32.totalorder %s18, 0
    %p53 = por %p51, %p52
    %p54 = scmp.ne.s32.totalorder %s40, %s41
    %p55 = scmp.eq.s32.totalorder %s19, 1
    %p56 = por %p54, %p55
    %p58 = scmp.ne.s32.totalorder %s41, %s57
    %p59 = scmp.eq.s32.totalorder %s19, 0
    %p60 = por %p58, %p59
    %s62 = sadd.s32 %s61, 1
    %p65 = scmp.eq.s32.totalorder %s13, 1
    %p66 = scmp.ne.s32.totalorder %s61, %s63
    %p67 = scmp.eq.s32.totalorder %s13, 0
    %p68 = por %p66, %p67
    %p69 = scmp.ne.s32.totalorder %s61, %s63
    %p70 = scmp.eq.s32.totalorder %s18, 1
    %p71 = por %p69, %p70
    %p72 = scmp.ne.s32.totalorder %s63, %s64
    %p73 = scmp.eq.s32.totalorder %s18, 0
    %p74 = por %p72, %p73
    %p75 = scmp.ne.s32.totalorder %s63, %s64
    %p76 = scmp.eq.s32.totalorder %s19, 1
    %p77 = por %p75, %p76
    %p79 = scmp.ne.s32.totalorder %s64, %s78
    %p80 = scmp.eq.s32.totalorder %s19, 0
    %p81 = por %p79, %p80
    %s83 = sadd.s32 %s82, 1
    %p86 = scmp.eq.s32.totalorder %s13, 1
    %p87 = scmp.ne.s32.totalorder %s82, %s84
    %p88 = scmp.eq.s32.totalorder %s13, 0
    %p89 = por %p87, %p88
    %p90 = scmp.ne.s32.totalorder %s82, %s84
    %p91 = scmp.eq.s32.totalorder %s18, 1
    %p92 = por %p90, %p91
    %p93 = scmp.ne.s32.totalorder %s84, %s85
    %p94 = scmp.eq.s32.totalorder %s18, 0
    %p95 = por %p93, %p94
    %p96 = scmp.ne.s32.totalorder %s84, %s85
    %p97 = scmp.eq.s32.totalorder %s19, 1
    %p98 = por %p96, %p97
    %p100 = scmp.ne.s32.totalorder %s85, %s99
    %p101 = scmp.eq.s32.totalorder %s19, 0
    %p102 = por %p100, %p101
    %s104 = sadd.s32 %s103, 1
    %p107 = scmp.eq.s32.totalorder %s13, 1
    %p108 = scmp.ne.s32.totalorder %s103, %s105
    %p109 = scmp.eq.s32.totalorder %s13, 0
    %p110 = por %p108, %p109
    %p111 = scmp.ne.s32.totalorder %s103, %s105
    %p112 = scmp.eq.s32.totalorder %s18, 1
    %p113 = por %p111, %p112
    %p114 = scmp.ne.s32.totalorder %s105, %s106
    %p115 = scmp.eq.s32.totalorder %s18, 0
    %p116 = por %p114, %p115
    %p117 = scmp.ne.s32.totalorder %s105, %s106
    %p118 = scmp.eq.s32.totalorder %s19, 1
    %p119 = por %p117, %p118
    %p121 = scmp.ne.s32.totalorder %s106, %s120
    %p122 = scmp.eq.s32.totalorder %s19, 0
    %p123 = por %p121, %p122
    %s125 = sadd.s32 %s124, 1
    %p128 = scmp.eq.s32.totalorder %s13, 1
    %p129 = scmp.ne.s32.totalorder %s124, %s126
    %p130 = scmp.eq.s32.totalorder %s13, 0
    %p131 = por %p129, %p130
    %p132 = scmp.ne.s32.totalorder %s124, %s126
    %p133 = scmp.eq.s32.totalorder %s18, 1
    %p134 = por %p132, %p133
    %p135 = scmp.ne.s32.totalorder %s126, %s127
    %p136 = scmp.eq.s32.totalorder %s18, 0
    %p137 = por %p135, %p136
    %p138 = scmp.ne.s32.totalorder %s126, %s127
    %p139 = scmp.eq.s32.totalorder %s19, 1
    %p140 = por %p138, %p139
    %p142 = scmp.ne.s32.totalorder %s127, %s141
    %p143 = scmp.eq.s32.totalorder %s19, 0
    %p144 = por %p142, %p143
    %s145 = ssub.s32 %s20, %s32
    %s146 = ssub.s32 %s21, %s28
    %s147 = sor.u32 %s145, %s146
    %p148 = scmp.eq.s32.totalorder %s147, 0
    %s150 = sadd.s32 %s149, 1
    %s151 = scalar_select %p148, %s149, %s150
    %p154 = pneg %p148
    %p155 = scmp.eq.s32.totalorder %s13, 1
    %p156 = por %p154, %p155
    %p157 = scmp.ne.s32.totalorder %s149, %s152
    %p158 = scmp.eq.s32.totalorder %s13, 0
    %p159 = por %p157, %p158
    %p160 = scmp.ne.s32.totalorder %s149, %s152
    %p161 = scmp.eq.s32.totalorder %s18, 1
    %p162 = por %p160, %p161
    %p163 = scmp.ne.s32.totalorder %s152, %s153
    %p164 = scmp.eq.s32.totalorder %s18, 0
    %p165 = por %p163, %p164
    %p166 = scmp.ne.s32.totalorder %s152, %s153
    %p167 = scmp.eq.s32.totalorder %s19, 1
    %p168 = por %p166, %p167
    %p170 = scmp.ne.s32.totalorder %s153, %s169
    %p171 = scmp.eq.s32.totalorder %s19, 0
    %p172 = por %p170, %p171
    %s173 = ssub.s32 %s20, %s32
    %p174 = scmp.eq.s32.totalorder %s173, 0
    %s176 = sadd.s32 %s175, 1
    %s177 = scalar_select %p174, %s175, %s176
    %p180 = pneg %p174
    %p181 = scmp.eq.s32.totalorder %s13, 1
    %p182 = por %p180, %p181
    %p183 = scmp.ne.s32.totalorder %s175, %s178
    %p184 = scmp.eq.s32.totalorder %s13, 0
    %p185 = por %p183, %p184
    %p186 = scmp.ne.s32.totalorder %s175, %s178
    %p187 = scmp.eq.s32.totalorder %s18, 1
    %p188 = por %p186, %p187
    %p189 = scmp.ne.s32.totalorder %s178, %s179
    %p190 = scmp.eq.s32.totalorder %s18, 0
    %p191 = por %p189, %p190
    %p192 = scmp.ne.s32.totalorder %s178, %s179
    %p193 = scmp.eq.s32.totalorder %s19, 1
    %p194 = por %p192, %p193
    %p196 = scmp.ne.s32.totalorder %s179, %s195
    %p197 = scmp.eq.s32.totalorder %s19, 0
    %p198 = por %p196, %p197
    %p199 = scmp.le.s32.totalorder 1, %s13
    %p200 = scmp.lt.s32.totalorder %s13, 3
    %p201 = pnand %p199, %p200
    %p202 = pneg %p201
    // Predicated region
    $region9: #{deeplabv3_multi_forward.2} parent=5 // pred_check
      _
    $region10: #{deeplabv3_multi_forward.2} parent=5 // pred_check_branch
      %204 = sbr.rel (%p201) target = $region12
    $region11: #{deeplabv3_multi_forward.2} parent=5 // pred_region
      %s205 = ssub.s32 %s13, 1
      // Predicated region
      $region13: #{deeplabv3_multi_forward.2} parent=11 // pred_check
        %p206 = pneg %p74
      $region14: #{deeplabv3_multi_forward.2} parent=11 // pred_check_branch
        %208 = sbr.rel (%p206) target = $region16
      $region15: #{deeplabv3_multi_forward.2} parent=11 // pred_region
        _
      $region16: #{deeplabv3_multi_forward.2} parent=11 // pred_fallthru
        _
      // Predicated region
      $region17: #{deeplabv3_multi_forward.2} parent=11 // pred_check
        %p209 = pneg %p95
      $region18: #{deeplabv3_multi_forward.2} parent=11 // pred_check_branch
        %211 = sbr.rel (%p209) target = $region20
      $region19: #{deeplabv3_multi_forward.2} parent=11 // pred_region
        _
      $region20: #{deeplabv3_multi_forward.2} parent=11 // pred_fallthru
        _
      // Predicated region
      $region21: #{deeplabv3_multi_forward.2} parent=11 // pred_check
        %p212 = pneg %p116
      $region22: #{deeplabv3_multi_forward.2} parent=11 // pred_check_branch
        %214 = sbr.rel (%p212) target = $region24
      $region23: #{deeplabv3_multi_forward.2} parent=11 // pred_region
        _
      $region24: #{deeplabv3_multi_forward.2} parent=11 // pred_fallthru
        _
      // Predicated region
      $region25: #{deeplabv3_multi_forward.2} parent=11 // pred_check
        %p215 = pneg %p137
      $region26: #{deeplabv3_multi_forward.2} parent=11 // pred_check_branch
        %217 = sbr.rel (%p215) target = $region28
      $region27: #{deeplabv3_multi_forward.2} parent=11 // pred_region
        _
      $region28: #{deeplabv3_multi_forward.2} parent=11 // pred_fallthru
        _
    $region12: #{deeplabv3_multi_forward.2} parent=5 // pred_fallthru
      _
    %p218 = scmp.lt.s32.totalorder %s13, 2
    // Predicated region
    $region29: #{deeplabv3_multi_forward.2} parent=5 // pred_check
      %p219 = pneg %p218
    $region30: #{deeplabv3_multi_forward.2} parent=5 // pred_check_branch
      %221 = sbr.rel (%p219) target = $region32
    $region31: #{deeplabv3_multi_forward.2} parent=5 // pred_region
      // Predicated region
      $region33: #{deeplabv3_multi_forward.2} parent=31 // pred_check
        %p222 = pneg %p47
      $region34: #{deeplabv3_multi_forward.2} parent=31 // pred_check_branch
        %224 = sbr.rel (%p222) target = $region36
      $region35: #{deeplabv3_multi_forward.2} parent=31 // pred_region
        %s225 = smul.u32 2, %s21
        %p226 = scmp.lt.s32.totalorder %s20, 1
        %s227 = scalar_select %p226, %s20, 1
        %p228 = scmp.lt.s32.totalorder %s225, 1
        %s229 = scalar_select %p228, %s225, 1
        %s230 = smul.addr %s227, 2
        %s231 = sadd.s32 %s229, %s230
        %s232 = smul.addr %s231, 8
        %s233 = scalar_lea.vmem %s0, %s232
        %s234 = smul.u32 2, %s21
      $region36: #{deeplabv3_multi_forward.2} parent=31 // pred_fallthru
        _
    $region32: #{deeplabv3_multi_forward.2} parent=5 // pred_fallthru
      _
    %p235 = scmp.le.s32.totalorder 1, %s13
    %p236 = scmp.lt.s32.totalorder %s13, 3
    %p237 = pnand %p235, %p236
    %p238 = pneg %p237
    // Predicated region
    $region37: #{deeplabv3_multi_forward.2} parent=5 // pred_check
      _
    $region38: #{deeplabv3_multi_forward.2} parent=5 // pred_check_branch
      %240 = sbr.rel (%p237) target = $region40
    $region39: #{deeplabv3_multi_forward.2} parent=5 // pred_region
      %s241 = ssub.s32 %s13, 1
      %s242 = smul.u32 2, %s23
      %p243 = scmp.lt.s32.totalorder %s22, 1
      %s244 = scalar_select %p243, %s22, 1
      %p245 = scmp.lt.s32.totalorder %s242, 1
      %s246 = scalar_select %p245, %s242, 1
      %s247 = smul.addr %s244, 2
      %s248 = sadd.s32 %s246, %s247
      %s249 = smul.addr %s248, 8
      %s250 = scalar_lea.vmem %s0, %s249
      %p251 = pneg %p53
      %p252 = pneg %p50
      %p253 = pneg %p74
      %p254 = pneg %p71
      %p255 = pneg %p95
      %p256 = pneg %p92
      %p257 = pneg %p116
      %p258 = pneg %p113
      %p259 = pneg %p137
      %p260 = pneg %p134
      %p261 = pneg %p165
      %p262 = pneg %p162
      %p263 = scmp.lt.s32.totalorder %s22, 1
      %s264 = scalar_select %p263, %s22, 1
      %p265 = scmp.lt.s32.totalorder %s23, 0
      %s266 = scalar_select %p265, %s23, 0
      %s267 = sadd.s32 %s266, %s264
      %s268 = scalar_lea.vmem %s5, %s267
      %p269 = pneg %p191
      %p270 = pneg %p188
      %p271 = scmp.lt.s32.totalorder %s22, 1
      %s272 = scalar_select %p271, %s22, 1
      %s273 = scalar_lea.vmem %s6, %s272
      %s274 = smul.u32 2, %s23
      %p275 = scmp.lt.s32.totalorder %s22, 1
      %s276 = scalar_select %p275, %s22, 1
      %p277 = scmp.lt.s32.totalorder %s274, 1
      %s278 = scalar_select %p277, %s274, 1
      %s279 = smul.addr %s276, 2
      %s280 = sadd.s32 %s278, %s279
      %s281 = smul.addr %s280, 8
      %s282 = scalar_lea.vmem %s0, %s281
      %s283 = smul.u32 2, %s23
      %p284 = scmp.lt.s32.totalorder %s22, 1
      %s285 = scalar_select %p284, %s22, 1
      %p286 = scmp.lt.s32.totalorder %s23, 0
      %s287 = scalar_select %p286, %s23, 0
      %s288 = sadd.s32 %s287, %s285
      %s289 = scalar_lea.vmem %s5, %s288
      %p290 = scmp.lt.s32.totalorder %s22, 1
      %s291 = scalar_select %p290, %s22, 1
      %s292 = scalar_lea.vmem %s6, %s291
      %v294 = vld [vmem:[%s282] sm:$0xff]
      %v295 = vld [vmem:[%s282 + $0x8] sm:$0xff]
      %v296 = vld [vmem:[%s1] sm:$0xff]
      %v297 = vld [vmem:[%s1 + $0x8] sm:$0xff]
      %v298 = vld [vmem:[%s1 + $0x10] sm:$0xff]
      %v299 = vld [vmem:[%s1 + $0x18] sm:$0xff]
      %v300 = vld [vmem:[%s1 + $0x20] sm:$0xff]
      %v301 = vld [vmem:[%s1 + $0x28] sm:$0xff]
      %v302 = vld [vmem:[%s1 + $0x30] sm:$0xff]
      %v303 = vld [vmem:[%s1 + $0x38] sm:$0xff]
      %v304 = vld [vmem:[%s1 + $0x40] sm:$0xff]
      %v305 = vld [vmem:[%s1 + $0x48] sm:$0xff]
      %v306 = vld [vmem:[%s1 + $0x50] sm:$0xff]
      %v307 = vld [vmem:[%s1 + $0x58] sm:$0xff]
      %v308 = vld [vmem:[%s1 + $0x60] sm:$0xff]
      %v309 = vld [vmem:[%s1 + $0x68] sm:$0xff]
      %v310 = vld [vmem:[%s1 + $0x70] sm:$0xff]
      %v311 = vld [vmem:[%s1 + $0x78] sm:$0xff]
      %v312 = vld [vmem:[%s2] sm:$0xff]
      %v313 = vld [vmem:[%s2 + $0x8] sm:$0xff]
      %v316 = vlaneseq
      %v317 = vshrl.u32 %v316, 7
      %v318 = vsub.s32 0, %v317
      %v319 = vrot.slane %v312, %v318
      %v320 = vlaneseq
      %v321 = vshrl.u32 %v320, 7
      %v322 = vsub.s32 1, %v321
      %v323 = vrot.slane %v312, %v322
      %v324 = vlaneseq
      %v325 = vshrl.u32 %v324, 7
      %v326 = vsub.s32 2, %v325
      %v327 = vrot.slane %v312, %v326
      %v328 = vlaneseq
      %v329 = vshrl.u32 %v328, 7
      %v330 = vsub.s32 3, %v329
      %v331 = vrot.slane %v312, %v330
      %v332 = vlaneseq
      %v333 = vshrl.u32 %v332, 7
      %v334 = vsub.s32 4, %v333
      %v335 = vrot.slane %v312, %v334
      %v336 = vlaneseq
      %v337 = vshrl.u32 %v336, 7
      %v338 = vsub.s32 5, %v337
      %v339 = vrot.slane %v312, %v338
      %v340 = vlaneseq
      %v341 = vshrl.u32 %v340, 7
      %v342 = vsub.s32 6, %v341
      %v343 = vrot.slane %v312, %v342
      %v344 = vlaneseq
      %v345 = vshrl.u32 %v344, 7
      %v346 = vsub.s32 7, %v345
      %v347 = vrot.slane %v312, %v346
      %v348 = vlaneseq
      %v349 = vshrl.u32 %v348, 7
      %v350 = vsub.s32 0, %v349
      %v351 = vrot.slane %v313, %v350
      %v352 = vlaneseq
      %v353 = vshrl.u32 %v352, 7
      %v354 = vsub.s32 1, %v353
      %v355 = vrot.slane %v313, %v354
      %v356 = vlaneseq
      %v357 = vshrl.u32 %v356, 7
      %v358 = vsub.s32 2, %v357
      %v359 = vrot.slane %v313, %v358
      %v360 = vlaneseq
      %v361 = vshrl.u32 %v360, 7
      %v362 = vsub.s32 3, %v361
      %v363 = vrot.slane %v313, %v362
      %v364 = vlaneseq
      %v365 = vshrl.u32 %v364, 7
      %v366 = vsub.s32 4, %v365
      %v367 = vrot.slane %v313, %v366
      %v368 = vlaneseq
      %v369 = vshrl.u32 %v368, 7
      %v370 = vsub.s32 5, %v369
      %v371 = vrot.slane %v313, %v370
      %v372 = vlaneseq
      %v373 = vshrl.u32 %v372, 7
      %v374 = vsub.s32 6, %v373
      %v375 = vrot.slane %v313, %v374
      %v376 = vlaneseq
      %v377 = vshrl.u32 %v376, 7
      %v378 = vsub.s32 7, %v377
      %v379 = vrot.slane %v313, %v378
      %vm396 = vcmask 64512
      %v398 = vsel %vm396, %v294, 0
      %v401 = vsel %vm396, %v295, 0
      %403 = vmatprep.subr.mxu0 %v297
      %404 = vmatpush1.msra.mxu0 %v296
      %405 = vmatprep.subr.mxu0 0.0
      %406 = vmatpush1.msra.mxu0 0.0
      %407 = vmatprep.subr.mxu0 0.0
      %408 = vmatpush1.msra.mxu0 0.0
      %409 = vmatprep.subr.mxu0 0.0
      %410 = vmatpush1.msra.mxu0 0.0
      %411 = vmatprep.subr.mxu0 0.0
      %412 = vmatpush1.msra.mxu0 0.0
      %413 = vmatprep.subr.mxu0 0.0
      %414 = vmatpush1.msra.mxu0 0.0
      %415 = vmatprep.subr.mxu0 0.0
      %416 = vmatpush1.msra.mxu0 0.0
      %417 = vmatprep.subr.mxu0 0.0
      %418 = vmatpush1.msra.mxu0 0.0
      %419 = vmatprep.subr.mxu0 0.0
      %420 = vmatpush1.msra.mxu0 0.0
      %421 = vmatprep.subr.mxu0 0.0
      %422 = vmatpush1.msra.mxu0 0.0
      %423 = vmatprep.subr.mxu0 0.0
      %424 = vmatpush1.msra.mxu0 0.0
      %425 = vmatprep.subr.mxu0 0.0
      %426 = vmatpush1.msra.mxu0 0.0
      %427 = vmatprep.subr.mxu0 0.0
      %428 = vmatpush1.msra.mxu0 0.0
      %429 = vmatprep.subr.mxu0 0.0
      %430 = vmatpush1.msra.mxu0 0.0
      %431 = vmatprep.subr.mxu0 0.0
      %432 = vmatpush1.msra.mxu0 0.0
      %433 = vmatprep.subr.mxu0 0.0
      %434 = vmatpush1.msra.mxu0 0.0
      %435 = vmatprep.subr.mxu0 0.0
      %436 = vmatpush1.msra.mxu0 0.0
      %437 = vmatprep.subr.mxu0 0.0
      %438 = vmatpush1.msra.mxu0 0.0
      %439 = vmatprep.subr.mxu0 0.0
      %440 = vmatpush1.msra.mxu0 0.0
      %441 = vmatprep.subr.mxu0 0.0
      %442 = vmatpush1.msra.mxu0 0.0
      %443 = vmatprep.subr.mxu0 0.0
      %444 = vmatpush1.msra.mxu0 0.0
      %445 = vmatprep.subr.mxu0 0.0
      %446 = vmatpush1.msra.mxu0 0.0
      %447 = vmatprep.subr.mxu0 0.0
      %448 = vmatpush1.msra.mxu0 0.0
      %449 = vmatprep.subr.mxu0 0.0
      %450 = vmatpush1.msra.mxu0 0.0
      %451 = vmatprep.subr.mxu0 0.0
      %452 = vmatpush1.msra.mxu0 0.0
      %453 = vmatprep.subr.mxu0 0.0
      %454 = vmatpush1.msra.mxu0 0.0
      %455 = vmatprep.subr.mxu0 0.0
      %456 = vmatpush1.msra.mxu0 0.0
      %457 = vmatprep.subr.mxu0 0.0
      %458 = vmatpush1.msra.mxu0 0.0
      %459 = vmatprep.subr.mxu0 0.0
      %460 = vmatpush1.msra.mxu0 0.0
      %461 = vmatprep.subr.mxu0 0.0
      %462 = vmatpush1.msra.mxu0 0.0
      %463 = vmatprep.subr.mxu0 0.0
      %464 = vmatpush1.msra.mxu0 0.0
      %465 = vmatprep.subr.mxu0 0.0
      %466 = vmatpush1.msra.mxu0 0.0
      %467 = vmatprep.mubr.f32.mxu0 0.0
      %468 = vmatmul.mubr.f32.gmra.mrb[0].mxu0 %v398
      %v469 = vpop.f32.mrb[0].mxu0
      %v470 = vadd.f32 %v319, %v469
      %v471 = vpop.f32.mrb[0].mxu0
      %v472 = vadd.f32 %v323, %v471
      %473 = vmatprep.mubr.f32.mxu0 0.0
      %474 = vmatmul.mubr.f32.gmra.mrb[0].mxu0 %v401
      %v475 = vpop.f32.mrb[0].mxu0
      %v476 = vadd.f32 %v319, %v475
      %v477 = vpop.f32.mrb[0].mxu0
      %v478 = vadd.f32 %v323, %v477
      %479 = vdwg.mxu0
      %480 = vmatprep.subr.mxu0 %v299
      %481 = vmatpush1.msra.mxu0 %v298
      %482 = vmatprep.subr.mxu0 0.0
      %483 = vmatpush1.msra.mxu0 0.0
      %484 = vmatprep.subr.mxu0 0.0
      %485 = vmatpush1.msra.mxu0 0.0
      %486 = vmatprep.subr.mxu0 0.0
      %487 = vmatpush1.msra.mxu0 0.0
      %488 = vmatprep.subr.mxu0 0.0
      %489 = vmatpush1.msra.mxu0 0.0
      %490 = vmatprep.subr.mxu0 0.0
      %491 = vmatpush1.msra.mxu0 0.0
      %492 = vmatprep.subr.mxu0 0.0
      %493 = vmatpush1.msra.mxu0 0.0
      %494 = vmatprep.subr.mxu0 0.0
      %495 = vmatpush1.msra.mxu0 0.0
      %496 = vmatprep.subr.mxu0 0.0
      %497 = vmatpush1.msra.mxu0 0.0
      %498 = vmatprep.subr.mxu0 0.0
      %499 = vmatpush1.msra.mxu0 0.0
      %500 = vmatprep.subr.mxu0 0.0
      %501 = vmatpush1.msra.mxu0 0.0
      %502 = vmatprep.subr.mxu0 0.0
      %503 = vmatpush1.msra.mxu0 0.0
      %504 = vmatprep.subr.mxu0 0.0
      %505 = vmatpush1.msra.mxu0 0.0
      %506 = vmatprep.subr.mxu0 0.0
      %507 = vmatpush1.msra.mxu0 0.0
      %508 = vmatprep.subr.mxu0 0.0
      %509 = vmatpush1.msra.mxu0 0.0
      %510 = vmatprep.subr.mxu0 0.0
      %511 = vmatpush1.msra.mxu0 0.0
      %512 = vmatprep.subr.mxu0 0.0
      %513 = vmatpush1.msra.mxu0 0.0
      %514 = vmatprep.subr.mxu0 0.0
      %515 = vmatpush1.msra.mxu0 0.0
      %516 = vmatprep.subr.mxu0 0.0
      %517 = vmatpush1.msra.mxu0 0.0
      %518 = vmatprep.subr.mxu0 0.0
      %519 = vmatpush1.msra.mxu0 0.0
      %520 = vmatprep.subr.mxu0 0.0
      %521 = vmatpush1.msra.mxu0 0.0
      %522 = vmatprep.subr.mxu0 0.0
      %523 = vmatpush1.msra.mxu0 0.0
      %524 = vmatprep.subr.mxu0 0.0
      %525 = vmatpush1.msra.mxu0 0.0
      %526 = vmatprep.subr.mxu0 0.0
      %527 = vmatpush1.msra.mxu0 0.0
      %528 = vmatprep.subr.mxu0 0.0
      %529 = vmatpush1.msra.mxu0 0.0
      %530 = vmatprep.subr.mxu0 0.0
      %531 = vmatpush1.msra.mxu0 0.0
      %532 = vmatprep.subr.mxu0 0.0
      %533 = vmatpush1.msra.mxu0 0.0
      %534 = vmatprep.subr.mxu0 0.0
      %535 = vmatpush1.msra.mxu0 0.0
      %536 = vmatprep.subr.mxu0 0.0
      %537 = vmatpush1.msra.mxu0 0.0
      %538 = vmatprep.subr.mxu0 0.0
      %539 = vmatpush1.msra.mxu0 0.0
      %540 = vmatprep.subr.mxu0 0.0
      %541 = vmatpush1.msra.mxu0 0.0
      %542 = vmatprep.subr.mxu0 0.0
      %543 = vmatpush1.msra.mxu0 0.0
      %544 = vmatprep.mubr.f32.mxu0 0.0
      %545 = vmatmul.mubr.f32.gmra.mrb[0].mxu0 %v398
      %v546 = vpop.f32.mrb[0].mxu0
      %v547 = vadd.f32 %v327, %v546
      %v548 = vpop.f32.mrb[0].mxu0
      %v549 = vadd.f32 %v331, %v548
      %550 = vmatprep.mubr.f32.mxu0 0.0
      %551 = vmatmul.mubr.f32.gmra.mrb[0].mxu0 %v401
      %v552 = vpop.f32.mrb[0].mxu0
      %v553 = vadd.f32 %v327, %v552
      %v554 = vpop.f32.mrb[0].mxu0
      %v555 = vadd.f32 %v331, %v554
      %556 = vdwg.mxu0
      %557 = vmatprep.subr.mxu0 %v301
      %558 = vmatpush1.msra.mxu0 %v300
      %559 = vmatprep.subr.mxu0 0.0
      %560 = vmatpush1.msra.mxu0 0.0
      %561 = vmatprep.subr.mxu0 0.0
      %562 = vmatpush1.msra.mxu0 0.0
      %563 = vmatprep.subr.mxu0 0.0
      %564 = vmatpush1.msra.mxu0 0.0
      %565 = vmatprep.subr.mxu0 0.0
      %566 = vmatpush1.msra.mxu0 0.0
      %567 = vmatprep.subr.mxu0 0.0
      %568 = vmatpush1.msra.mxu0 0.0
      %569 = vmatprep.subr.mxu0 0.0
      %570 = vmatpush1.msra.mxu0 0.0
      %571 = vmatprep.subr.mxu0 0.0
      %572 = vmatpush1.msra.mxu0 0.0
      %573 = vmatprep.subr.mxu0 0.0
      %574 = vmatpush1.msra.mxu0 0.0
      %575 = vmatprep.subr.mxu0 0.0
      %576 = vmatpush1.msra.mxu0 0.0
      %577 = vmatprep.subr.mxu0 0.0
      %578 = vmatpush1.msra.mxu0 0.0
      %579 = vmatprep.subr.mxu0 0.0
      %580 = vmatpush1.msra.mxu0 0.0
      %581 = vmatprep.subr.mxu0 0.0
      %582 = vmatpush1.msra.mxu0 0.0
      %583 = vmatprep.subr.mxu0 0.0
      %584 = vmatpush1.msra.mxu0 0.0
      %585 = vmatprep.subr.mxu0 0.0
      %586 = vmatpush1.msra.mxu0 0.0
      %587 = vmatprep.subr.mxu0 0.0
      %588 = vmatpush1.msra.mxu0 0.0
      %589 = vmatprep.subr.mxu0 0.0
      %590 = vmatpush1.msra.mxu0 0.0
      %591 = vmatprep.subr.mxu0 0.0
      %592 = vmatpush1.msra.mxu0 0.0
      %593 = vmatprep.subr.mxu0 0.0
      %594 = vmatpush1.msra.mxu0 0.0
      %595 = vmatprep.subr.mxu0 0.0
      %596 = vmatpush1.msra.mxu0 0.0
      %597 = vmatprep.subr.mxu0 0.0
      %598 = vmatpush1.msra.mxu0 0.0
      %599 = vmatprep.subr.mxu0 0.0
      %600 = vmatpush1.msra.mxu0 0.0
      %601 = vmatprep.subr.mxu0 0.0
      %602 = vmatpush1.msra.mxu0 0.0
      %603 = vmatprep.subr.mxu0 0.0
      %604 = vmatpush1.msra.mxu0 0.0
      %605 = vmatprep.subr.mxu0 0.0
      %606 = vmatpush1.msra.mxu0 0.0
      %607 = vmatprep.subr.mxu0 0.0
      %608 = vmatpush1.msra.mxu0 0.0
      %609 = vmatprep.subr.mxu0 0.0
      %610 = vmatpush1.msra.mxu0 0.0
      %611 = vmatprep.subr.mxu0 0.0
      %612 = vmatpush1.msra.mxu0 0.0
      %613 = vmatprep.subr.mxu0 0.0
      %614 = vmatpush1.msra.mxu0 0.0
      %615 = vmatprep.subr.mxu0 0.0
      %616 = vmatpush1.msra.mxu0 0.0
      %617 = vmatprep.subr.mxu0 0.0
      %618 = vmatpush1.msra.mxu0 0.0
      %619 = vmatprep.subr.mxu0 0.0
      %620 = vmatpush1.msra.mxu0 0.0
      %621 = vmatprep.mubr.f32.mxu0 0.0
      %622 = vmatmul.mubr.f32.gmra.mrb[0].mxu0 %v398
      %v623 = vpop.f32.mrb[0].mxu0
      %v624 = vadd.f32 %v335, %v623
      %v625 = vpop.f32.mrb[0].mxu0
      %v626 = vadd.f32 %v339, %v625
      %627 = vmatprep.mubr.f32.mxu0 0.0
      %628 = vmatmul.mubr.f32.gmra.mrb[0].mxu0 %v401
      %v629 = vpop.f32.mrb[0].mxu0
      %v630 = vadd.f32 %v335, %v629
      %v631 = vpop.f32.mrb[0].mxu0
      %v632 = vadd.f32 %v339, %v631
      %633 = vdwg.mxu0
      %634 = vmatprep.subr.mxu0 %v303
      %635 = vmatpush1.msra.mxu0 %v302
      %636 = vmatprep.subr.mxu0 0.0
      %637 = vmatpush1.msra.mxu0 0.0
      %638 = vmatprep.subr.mxu0 0.0
      %639 = vmatpush1.msra.mxu0 0.0
      %640 = vmatprep.subr.mxu0 0.0
      %641 = vmatpush1.msra.mxu0 0.0
      %642 = vmatprep.subr.mxu0 0.0
      %643 = vmatpush1.msra.mxu0 0.0
      %644 = vmatprep.subr.mxu0 0.0
      %645 = vmatpush1.msra.mxu0 0.0
      %646 = vmatprep.subr.mxu0 0.0
      %647 = vmatpush1.msra.mxu0 0.0
      %648 = vmatprep.subr.mxu0 0.0
      %649 = vmatpush1.msra.mxu0 0.0
      %650 = vmatprep.subr.mxu0 0.0
      %651 = vmatpush1.msra.mxu0 0.0
      %652 = vmatprep.subr.mxu0 0.0
      %653 = vmatpush1.msra.mxu0 0.0
      %654 = vmatprep.subr.mxu0 0.0
      %655 = vmatpush1.msra.mxu0 0.0
      %656 = vmatprep.subr.mxu0 0.0
      %657 = vmatpush1.msra.mxu0 0.0
      %658 = vmatprep.subr.mxu0 0.0
      %659 = vmatpush1.msra.mxu0 0.0
      %660 = vmatprep.subr.mxu0 0.0
      %661 = vmatpush1.msra.mxu0 0.0
      %662 = vmatprep.subr.mxu0 0.0
      %663 = vmatpush1.msra.mxu0 0.0
      %664 = vmatprep.subr.mxu0 0.0
      %665 = vmatpush1.msra.mxu0 0.0
      %666 = vmatprep.subr.mxu0 0.0
      %667 = vmatpush1.msra.mxu0 0.0
      %668 = vmatprep.subr.mxu0 0.0
      %669 = vmatpush1.msra.mxu0 0.0
      %670 = vmatprep.subr.mxu0 0.0
      %671 = vmatpush1.msra.mxu0 0.0
      %672 = vmatprep.subr.mxu0 0.0
      %673 = vmatpush1.msra.mxu0 0.0
      %674 = vmatprep.subr.mxu0 0.0
      %675 = vmatpush1.msra.mxu0 0.0
      %676 = vmatprep.subr.mxu0 0.0
      %677 = vmatpush1.msra.mxu0 0.0
      %678 = vmatprep.subr.mxu0 0.0
      %679 = vmatpush1.msra.mxu0 0.0
      %680 = vmatprep.subr.mxu0 0.0
      %681 = vmatpush1.msra.mxu0 0.0
      %682 = vmatprep.subr.mxu0 0.0
      %683 = vmatpush1.msra.mxu0 0.0
      %684 = vmatprep.subr.mxu0 0.0
      %685 = vmatpush1.msra.mxu0 0.0
      %686 = vmatprep.subr.mxu0 0.0
      %687 = vmatpush1.msra.mxu0 0.0
      %688 = vmatprep.subr.mxu0 0.0
      %689 = vmatpush1.msra.mxu0 0.0
      %690 = vmatprep.subr.mxu0 0.0
      %691 = vmatpush1.msra.mxu0 0.0
      %692 = vmatprep.subr.mxu0 0.0
      %693 = vmatpush1.msra.mxu0 0.0
      %694 = vmatprep.subr.mxu0 0.0
      %695 = vmatpush1.msra.mxu0 0.0
      %696 = vmatprep.subr.mxu0 0.0
      %697 = vmatpush1.msra.mxu0 0.0
      %698 = vmatprep.mubr.f32.mxu0 0.0
      %699 = vmatmul.mubr.f32.gmra.mrb[0].mxu0 %v398
      %v700 = vpop.f32.mrb[0].mxu0
      %v701 = vadd.f32 %v343, %v700
      %v702 = vpop.f32.mrb[0].mxu0
      %v703 = vadd.f32 %v347, %v702
      %704 = vmatprep.mubr.f32.mxu0 0.0
      %705 = vmatmul.mubr.f32.gmra.mrb[0].mxu0 %v401
      %v706 = vpop.f32.mrb[0].mxu0
      %v707 = vadd.f32 %v343, %v706
      %v708 = vpop.f32.mrb[0].mxu0
      %v709 = vadd.f32 %v347, %v708
      %710 = vdwg.mxu0
      %711 = vmatprep.subr.mxu0 %v305
      %712 = vmatpush1.msra.mxu0 %v304
      %713 = vmatprep.subr.mxu0 0.0
      %714 = vmatpush1.msra.mxu0 0.0
      %715 = vmatprep.subr.mxu0 0.0
      %716 = vmatpush1.msra.mxu0 0.0
      %717 = vmatprep.subr.mxu0 0.0
      %718 = vmatpush1.msra.mxu0 0.0
      %719 = vmatprep.subr.mxu0 0.0
      %720 = vmatpush1.msra.mxu0 0.0
      %721 = vmatprep.subr.mxu0 0.0
      %722 = vmatpush1.msra.mxu0 0.0
      %723 = vmatprep.subr.mxu0 0.0
      %724 = vmatpush1.msra.mxu0 0.0
      %725 = vmatprep.subr.mxu0 0.0
      %726 = vmatpush1.msra.mxu0 0.0
      %727 = vmatprep.subr.mxu0 0.0
      %728 = vmatpush1.msra.mxu0 0.0
      %729 = vmatprep.subr.mxu0 0.0
      %730 = vmatpush1.msra.mxu0 0.0
      %731 = vmatprep.subr.mxu0 0.0
      %732 = vmatpush1.msra.mxu0 0.0
      %733 = vmatprep.subr.mxu0 0.0
      %734 = vmatpush1.msra.mxu0 0.0
      %735 = vmatprep.subr.mxu0 0.0
      %736 = vmatpush1.msra.mxu0 0.0
      %737 = vmatprep.subr.mxu0 0.0
      %738 = vmatpush1.msra.mxu0 0.0
      %739 = vmatprep.subr.mxu0 0.0
      %740 = vmatpush1.msra.mxu0 0.0
      %741 = vmatprep.subr.mxu0 0.0
      %742 = vmatpush1.msra.mxu0 0.0
      %743 = vmatprep.subr.mxu0 0.0
      %744 = vmatpush1.msra.mxu0 0.0
      %745 = vmatprep.subr.mxu0 0.0
      %746 = vmatpush1.msra.mxu0 0.0
      %747 = vmatprep.subr.mxu0 0.0
      %748 = vmatpush1.msra.mxu0 0.0
      %749 = vmatprep.subr.mxu0 0.0
      %750 = vmatpush1.msra.mxu0 0.0
      %751 = vmatprep.subr.mxu0 0.0
      %752 = vmatpush1.msra.mxu0 0.0
      %753 = vmatprep.subr.mxu0 0.0
      %754 = vmatpush1.msra.mxu0 0.0
      %755 = vmatprep.subr.mxu0 0.0
      %756 = vmatpush1.msra.mxu0 0.0
      %757 = vmatprep.subr.mxu0 0.0
      %758 = vmatpush1.msra.mxu0 0.0
      %759 = vmatprep.subr.mxu0 0.0
      %760 = vmatpush1.msra.mxu0 0.0
      %761 = vmatprep.subr.mxu0 0.0
      %762 = vmatpush1.msra.mxu0 0.0
      %763 = vmatprep.subr.mxu0 0.0
      %764 = vmatpush1.msra.mxu0 0.0
      %765 = vmatprep.subr.mxu0 0.0
      %766 = vmatpush1.msra.mxu0 0.0
      %767 = vmatprep.subr.mxu0 0.0
      %768 = vmatpush1.msra.mxu0 0.0
      %769 = vmatprep.subr.mxu0 0.0
      %770 = vmatpush1.msra.mxu0 0.0
      %771 = vmatprep.subr.mxu0 0.0
      %772 = vmatpush1.msra.mxu0 0.0
      %773 = vmatprep.subr.mxu0 0.0
      %774 = vmatpush1.msra.mxu0 0.0
      %775 = vmatprep.mubr.f32.mxu0 0.0
      %776 = vmatmul.mubr.f32.gmra.mrb[0].mxu0 %v398
      %v777 = vpop.f32.mrb[0].mxu0
      %v778 = vadd.f32 %v351, %v777
      %v779 = vpop.f32.mrb[0].mxu0
      %v780 = vadd.f32 %v355, %v779
      %781 = vmatprep.mubr.f32.mxu0 0.0
      %782 = vmatmul.mubr.f32.gmra.mrb[0].mxu0 %v401
      %v783 = vpop.f32.mrb[0].mxu0
      %v784 = vadd.f32 %v351, %v783
      %v785 = vpop.f32.mrb[0].mxu0
      %v786 = vadd.f32 %v355, %v785
      %787 = vdwg.mxu0
      %788 = vmatprep.subr.mxu0 %v307
      %789 = vmatpush1.msra.mxu0 %v306
      %790 = vmatprep.subr.mxu0 0.0
      %791 = vmatpush1.msra.mxu0 0.0
      %792 = vmatprep.subr.mxu0 0.0
      %793 = vmatpush1.msra.mxu0 0.0
      %794 = vmatprep.subr.mxu0 0.0
      %795 = vmatpush1.msra.mxu0 0.0
      %796 = vmatprep.subr.mxu0 0.0
      %797 = vmatpush1.msra.mxu0 0.0
      %798 = vmatprep.subr.mxu0 0.0
      %799 = vmatpush1.msra.mxu0 0.0
      %800 = vmatprep.subr.mxu0 0.0
      %801 = vmatpush1.msra.mxu0 0.0
      %802 = vmatprep.subr.mxu0 0.0
      %803 = vmatpush1.msra.mxu0 0.0
      %804 = vmatprep.subr.mxu0 0.0
      %805 = vmatpush1.msra.mxu0 0.0
      %806 = vmatprep.subr.mxu0 0.0
      %807 = vmatpush1.msra.mxu0 0.0
      %808 = vmatprep.subr.mxu0 0.0
      %809 = vmatpush1.msra.mxu0 0.0
      %810 = vmatprep.subr.mxu0 0.0
      %811 = vmatpush1.msra.mxu0 0.0
      %812 = vmatprep.subr.mxu0 0.0
      %813 = vmatpush1.msra.mxu0 0.0
      %814 = vmatprep.subr.mxu0 0.0
      %815 = vmatpush1.msra.mxu0 0.0
      %816 = vmatprep.subr.mxu0 0.0
      %817 = vmatpush1.msra.mxu0 0.0
      %818 = vmatprep.subr.mxu0 0.0
      %819 = vmatpush1.msra.mxu0 0.0
      %820 = vmatprep.subr.mxu0 0.0
      %821 = vmatpush1.msra.mxu0 0.0
      %822 = vmatprep.subr.mxu0 0.0
      %823 = vmatpush1.msra.mxu0 0.0
      %824 = vmatprep.subr.mxu0 0.0
      %825 = vmatpush1.msra.mxu0 0.0
      %826 = vmatprep.subr.mxu0 0.0
      %827 = vmatpush1.msra.mxu0 0.0
      %828 = vmatprep.subr.mxu0 0.0
      %829 = vmatpush1.msra.mxu0 0.0
      %830 = vmatprep.subr.mxu0 0.0
      %831 = vmatpush1.msra.mxu0 0.0
      %832 = vmatprep.subr.mxu0 0.0
      %833 = vmatpush1.msra.mxu0 0.0
      %834 = vmatprep.subr.mxu0 0.0
      %835 = vmatpush1.msra.mxu0 0.0
      %836 = vmatprep.subr.mxu0 0.0
      %837 = vmatpush1.msra.mxu0 0.0
      %838 = vmatprep.subr.mxu0 0.0
      %839 = vmatpush1.msra.mxu0 0.0
      %840 = vmatprep.subr.mxu0 0.0
      %841 = vmatpush1.msra.mxu0 0.0
      %842 = vmatprep.subr.mxu0 0.0
      %843 = vmatpush1.msra.mxu0 0.0
      %844 = vmatprep.subr.mxu0 0.0
      %845 = vmatpush1.msra.mxu0 0.0
      %846 = vmatprep.subr.mxu0 0.0
      %847 = vmatpush1.msra.mxu0 0.0
      %848 = vmatprep.subr.mxu0 0.0
      %849 = vmatpush1.msra.mxu0 0.0
      %850 = vmatprep.subr.mxu0 0.0
      %851 = vmatpush1.msra.mxu0 0.0
      %852 = vmatprep.mubr.f32.mxu0 0.0
      %853 = vmatmul.mubr.f32.gmra.mrb[0].mxu0 %v398
      %v854 = vpop.f32.mrb[0].mxu0
      %v855 = vadd.f32 %v359, %v854
      %v856 = vpop.f32.mrb[0].mxu0
      %v857 = vadd.f32 %v363, %v856
      %858 = vmatprep.mubr.f32.mxu0 0.0
      %859 = vmatmul.mubr.f32.gmra.mrb[0].mxu0 %v401
      %v860 = vpop.f32.mrb[0].mxu0
      %v861 = vadd.f32 %v359, %v860
      %v862 = vpop.f32.mrb[0].mxu0
      %v863 = vadd.f32 %v363, %v862
      %864 = vdwg.mxu0
      %865 = vmatprep.subr.mxu0 %v309
      %866 = vmatpush1.msra.mxu0 %v308
      %867 = vmatprep.subr.mxu0 0.0
      %868 = vmatpush1.msra.mxu0 0.0
      %869 = vmatprep.subr.mxu0 0.0
      %870 = vmatpush1.msra.mxu0 0.0
      %871 = vmatprep.subr.mxu0 0.0
      %872 = vmatpush1.msra.mxu0 0.0
      %873 = vmatprep.subr.mxu0 0.0
      %874 = vmatpush1.msra.mxu0 0.0
      %875 = vmatprep.subr.mxu0 0.0
      %876 = vmatpush1.msra.mxu0 0.0
      %877 = vmatprep.subr.mxu0 0.0
      %878 = vmatpush1.msra.mxu0 0.0
      %879 = vmatprep.subr.mxu0 0.0
      %880 = vmatpush1.msra.mxu0 0.0
      %881 = vmatprep.subr.mxu0 0.0
      %882 = vmatpush1.msra.mxu0 0.0
      %883 = vmatprep.subr.mxu0 0.0
      %884 = vmatpush1.msra.mxu0 0.0
      %885 = vmatprep.subr.mxu0 0.0
      %886 = vmatpush1.msra.mxu0 0.0
      %887 = vmatprep.subr.mxu0 0.0
      %888 = vmatpush1.msra.mxu0 0.0
      %889 = vmatprep.subr.mxu0 0.0
      %890 = vmatpush1.msra.mxu0 0.0
      %891 = vmatprep.subr.mxu0 0.0
      %892 = vmatpush1.msra.mxu0 0.0
      %893 = vmatprep.subr.mxu0 0.0
      %894 = vmatpush1.msra.mxu0 0.0
      %895 = vmatprep.subr.mxu0 0.0
      %896 = vmatpush1.msra.mxu0 0.0
      %897 = vmatprep.subr.mxu0 0.0
      %898 = vmatpush1.msra.mxu0 0.0
      %899 = vmatprep.subr.mxu0 0.0
      %900 = vmatpush1.msra.mxu0 0.0
      %901 = vmatprep.subr.mxu0 0.0
      %902 = vmatpush1.msra.mxu0 0.0
      %903 = vmatprep.subr.mxu0 0.0
      %904 = vmatpush1.msra.mxu0 0.0
      %905 = vmatprep.subr.mxu0 0.0
      %906 = vmatpush1.msra.mxu0 0.0
      %907 = vmatprep.subr.mxu0 0.0
      %908 = vmatpush1.msra.mxu0 0.0
      %909 = vmatprep.subr.mxu0 0.0
      %910 = vmatpush1.msra.mxu0 0.0
      %911 = vmatprep.subr.mxu0 0.0
      %912 = vmatpush1.msra.mxu0 0.0
      %913 = vmatprep.subr.mxu0 0.0
      %914 = vmatpush1.msra.mxu0 0.0
      %915 = vmatprep.subr.mxu0 0.0
      %916 = vmatpush1.msra.mxu0 0.0
      %917 = vmatprep.subr.mxu0 0.0
      %918 = vmatpush1.msra.mxu0 0.0
      %919 = vmatprep.subr.mxu0 0.0
      %920 = vmatpush1.msra.mxu0 0.0
      %921 = vmatprep.subr.mxu0 0.0
      %922 = vmatpush1.msra.mxu0 0.0
      %923 = vmatprep.subr.mxu0 0.0
      %924 = vmatpush1.msra.mxu0 0.0
      %925 = vmatprep.subr.mxu0 0.0
      %926 = vmatpush1.msra.mxu0 0.0
      %927 = vmatprep.subr.mxu0 0.0
      %928 = vmatpush1.msra.mxu0 0.0
      %929 = vmatprep.mubr.f32.mxu0 0.0
      %930 = vmatmul.mubr.f32.gmra.mrb[0].mxu0 %v398
      %v931 = vpop.f32.mrb[0].mxu0
      %v932 = vadd.f32 %v367, %v931
      %v933 = vpop.f32.mrb[0].mxu0
      %v934 = vadd.f32 %v371, %v933
      %935 = vmatprep.mubr.f32.mxu0 0.0
      %936 = vmatmul.mubr.f32.gmra.mrb[0].mxu0 %v401
      %v937 = vpop.f32.mrb[0].mxu0
      %v938 = vadd.f32 %v367, %v937
      %v939 = vpop.f32.mrb[0].mxu0
      %v940 = vadd.f32 %v371, %v939
      %941 = vdwg.mxu0
      %942 = vmatprep.subr.mxu0 %v311
      %943 = vmatpush1.msra.mxu0 %v310
      %944 = vmatprep.subr.mxu0 0.0
      %945 = vmatpush1.msra.mxu0 0.0
      %946 = vmatprep.subr.mxu0 0.0
      %947 = vmatpush1.msra.mxu0 0.0
      %948 = vmatprep.subr.mxu0 0.0
      %949 = vmatpush1.msra.mxu0 0.0
      %950 = vmatprep.subr.mxu0 0.0
      %951 = vmatpush1.msra.mxu0 0.0
      %952 = vmatprep.subr.mxu0 0.0
      %953 = vmatpush1.msra.mxu0 0.0
      %954 = vmatprep.subr.mxu0 0.0
      %955 = vmatpush1.msra.mxu0 0.0
      %956 = vmatprep.subr.mxu0 0.0
      %957 = vmatpush1.msra.mxu0 0.0
      %958 = vmatprep.subr.mxu0 0.0
      %959 = vmatpush1.msra.mxu0 0.0
      %960 = vmatprep.subr.mxu0 0.0
      %961 = vmatpush1.msra.mxu0 0.0
      %962 = vmatprep.subr.mxu0 0.0
      %963 = vmatpush1.msra.mxu0 0.0
      %964 = vmatprep.subr.mxu0 0.0
      %965 = vmatpush1.msra.mxu0 0.0
      %966 = vmatprep.subr.mxu0 0.0
      %967 = vmatpush1.msra.mxu0 0.0
      %968 = vmatprep.subr.mxu0 0.0
      %969 = vmatpush1.msra.mxu0 0.0
      %970 = vmatprep.subr.mxu0 0.0
      %971 = vmatpush1.msra.mxu0 0.0
      %972 = vmatprep.subr.mxu0 0.0
      %973 = vmatpush1.msra.mxu0 0.0
      %974 = vmatprep.subr.mxu0 0.0
      %975 = vmatpush1.msra.mxu0 0.0
      %976 = vmatprep.subr.mxu0 0.0
      %977 = vmatpush1.msra.mxu0 0.0
      %978 = vmatprep.subr.mxu0 0.0
      %979 = vmatpush1.msra.mxu0 0.0
      %980 = vmatprep.subr.mxu0 0.0
      %981 = vmatpush1.msra.mxu0 0.0
      %982 = vmatprep.subr.mxu0 0.0
      %983 = vmatpush1.msra.mxu0 0.0
      %984 = vmatprep.subr.mxu0 0.0
      %985 = vmatpush1.msra.mxu0 0.0
      %986 = vmatprep.subr.mxu0 0.0
      %987 = vmatpush1.msra.mxu0 0.0
      %988 = vmatprep.subr.mxu0 0.0
      %989 = vmatpush1.msra.mxu0 0.0
      %990 = vmatprep.subr.mxu0 0.0
      %991 = vmatpush1.msra.mxu0 0.0
      %992 = vmatprep.subr.mxu0 0.0
      %993 = vmatpush1.msra.mxu0 0.0
      %994 = vmatprep.subr.mxu0 0.0
      %995 = vmatpush1.msra.mxu0 0.0
      %996 = vmatprep.subr.mxu0 0.0
      %997 = vmatpush1.msra.mxu0 0.0
      %998 = vmatprep.subr.mxu0 0.0
      %999 = vmatpush1.msra.mxu0 0.0
      %1000 = vmatprep.subr.mxu0 0.0
      %1001 = vmatpush1.msra.mxu0 0.0
      %1002 = vmatprep.subr.mxu0 0.0
      %1003 = vmatpush1.msra.mxu0 0.0
      %1004 = vmatprep.subr.mxu0 0.0
      %1005 = vmatpush1.msra.mxu0 0.0
      %1006 = vmatprep.mubr.f32.mxu0 0.0
      %1007 = vmatmul.mubr.f32.gmra.mrb[0].mxu0 %v398
      %v1008 = vpop.f32.mrb[0].mxu0
      %v1009 = vadd.f32 %v375, %v1008
      %v1010 = vpop.f32.mrb[0].mxu0
      %v1011 = vadd.f32 %v379, %v1010
      %1012 = vmatprep.mubr.f32.mxu0 0.0
      %1013 = vmatmul.mubr.f32.gmra.mrb[0].mxu0 %v401
      %v1014 = vpop.f32.mrb[0].mxu0
      %v1015 = vadd.f32 %v375, %v1014
      %v1016 = vpop.f32.mrb[0].mxu0
      %v1017 = vadd.f32 %v379, %v1016
      %1018 = vdwg.mxu0
      %v1019 = vmax.f32 %v470, 0.0
      %v1020 = vmax.f32 %v472, 0.0
      %v1021 = vmax.f32 %v547, 0.0
      %v1022 = vmax.f32 %v549, 0.0
      %v1023 = vmax.f32 %v624, 0.0
      %v1024 = vmax.f32 %v626, 0.0
      %v1025 = vmax.f32 %v701, 0.0
      %v1026 = vmax.f32 %v703, 0.0
      %v1027 = vmax.f32 %v778, 0.0
      %v1028 = vmax.f32 %v780, 0.0
      %v1029 = vmax.f32 %v855, 0.0
      %v1030 = vmax.f32 %v857, 0.0
      %v1031 = vmax.f32 %v932, 0.0
      %v1032 = vmax.f32 %v934, 0.0
      %v1033 = vmax.f32 %v1009, 0.0
      %v1034 = vmax.f32 %v1011, 0.0
      %v1035 = vmax.f32 %v476, 0.0
      %v1036 = vmax.f32 %v478, 0.0
      %v1037 = vmax.f32 %v553, 0.0
      %v1038 = vmax.f32 %v555, 0.0
      %v1039 = vmax.f32 %v630, 0.0
      %v1040 = vmax.f32 %v632, 0.0
      %v1041 = vmax.f32 %v707, 0.0
      %v1042 = vmax.f32 %v709, 0.0
      %v1043 = vmax.f32 %v784, 0.0
      %v1044 = vmax.f32 %v786, 0.0
      %v1045 = vmax.f32 %v861, 0.0
      %v1046 = vmax.f32 %v863, 0.0
      %v1047 = vmax.f32 %v938, 0.0
      %v1048 = vmax.f32 %v940, 0.0
      %v1049 = vmax.f32 %v1015, 0.0
      %v1050 = vmax.f32 %v1017, 0.0
      %v1051 = vpack.c.bf16 %v1035, %v1019
      %v1052 = vpack.c.bf16 %v1036, %v1020
      %v1053 = vpack.c.bf16 %v1037, %v1021
      %v1054 = vpack.c.bf16 %v1038, %v1022
      %v1055 = vpack.c.bf16 %v1039, %v1023
      %v1056 = vpack.c.bf16 %v1040, %v1024
      %v1057 = vpack.c.bf16 %v1041, %v1025
      %v1058 = vpack.c.bf16 %v1042, %v1026
      %v1059 = vpack.c.bf16 %v1043, %v1027
      %v1060 = vpack.c.bf16 %v1044, %v1028
      %v1061 = vpack.c.bf16 %v1045, %v1029
      %v1062 = vpack.c.bf16 %v1046, %v1030
      %v1063 = vpack.c.bf16 %v1047, %v1031
      %v1064 = vpack.c.bf16 %v1048, %v1032
      %v1065 = vpack.c.bf16 %v1049, %v1033
      %v1066 = vpack.c.bf16 %v1050, %v1034
      %v1067 = vld [vmem:[%s3] sm:$0xf]
      %v1068 = vld [vmem:[%s3 + $0x4] sm:$0xf]
      %v1069 = vld [vmem:[%s3 + $0x8] sm:$0xf]
      %v1070 = vld [vmem:[%s3 + $0xc] sm:$0xf]
      %v1071 = vld [vmem:[%s3 + $0x10] sm:$0xf]
      %v1072 = vld [vmem:[%s3 + $0x14] sm:$0xf]
      %v1073 = vld [vmem:[%s3 + $0x18] sm:$0xf]
      %v1074 = vld [vmem:[%s3 + $0x1c] sm:$0xf]
      %v1075 = vld [vmem:[%s3 + $0x20] sm:$0xf]
      %v1076 = vld [vmem:[%s3 + $0x24] sm:$0xf]
      %v1077 = vld [vmem:[%s3 + $0x28] sm:$0xf]
      %v1078 = vld [vmem:[%s3 + $0x2c] sm:$0xf]
      %v1079 = vld [vmem:[%s3 + $0x30] sm:$0xf]
      %v1080 = vld [vmem:[%s3 + $0x34] sm:$0xf]
      %v1081 = vld [vmem:[%s3 + $0x38] sm:$0xf]
      %v1082 = vld [vmem:[%s3 + $0x3c] sm:$0xf]
      %v1083 = vld [vmem:[%s3 + $0x40] sm:$0xf]
      %v1084 = vld [vmem:[%s3 + $0x44] sm:$0xf]
      %v1085 = vld [vmem:[%s3 + $0x48] sm:$0xf]
      %v1086 = vld [vmem:[%s3 + $0x4c] sm:$0xf]
      %v1087 = vld [vmem:[%s3 + $0x50] sm:$0xf]
      %v1088 = vld [vmem:[%s3 + $0x54] sm:$0xf]
      %v1089 = vld [vmem:[%s3 + $0x58] sm:$0xf]
      %v1090 = vld [vmem:[%s3 + $0x5c] sm:$0xf]
      %v1091 = vld [vmem:[%s3 + $0x60] sm:$0xf]
      %v1092 = vld [vmem:[%s3 + $0x64] sm:$0xf]
      %v1093 = vld [vmem:[%s3 + $0x68] sm:$0xf]
      %v1094 = vld [vmem:[%s3 + $0x6c] sm:$0xf]
      %v1095 = vld [vmem:[%s3 + $0x70] sm:$0xf]
      %v1096 = vld [vmem:[%s3 + $0x74] sm:$0xf]
      %v1097 = vld [vmem:[%s3 + $0x78] sm:$0xf]
      %v1098 = vld [vmem:[%s3 + $0x7c] sm:$0xf]
      %v1099 = vld [vmem:[%s3 + $0x80] sm:$0xf]
      %v1100 = vld [vmem:[%s3 + $0x84] sm:$0xf]
      %v1101 = vld [vmem:[%s3 + $0x88] sm:$0xf]
      %v1102 = vld [vmem:[%s3 + $0x8c] sm:$0xf]
      %v1103 = vld [vmem:[%s3 + $0x90] sm:$0xf]
      %v1104 = vld [vmem:[%s3 + $0x94] sm:$0xf]
      %v1105 = vld [vmem:[%s3 + $0x98] sm:$0xf]
      %v1106 = vld [vmem:[%s3 + $0x9c] sm:$0xf]
      %v1107 = vld [vmem:[%s3 + $0xa0] sm:$0xf]
      %v1108 = vld [vmem:[%s3 + $0xa4] sm:$0xf]
      %v1109 = vld [vmem:[%s3 + $0xa8] sm:$0xf]
      %v1110 = vld [vmem:[%s3 + $0xac] sm:$0xf]
      %v1111 = vld [vmem:[%s3 + $0xb0] sm:$0xf]
      %v1112 = vld [vmem:[%s3 + $0xb4] sm:$0xf]
      %v1113 = vld [vmem:[%s3 + $0xb8] sm:$0xf]
      %v1114 = vld [vmem:[%s3 + $0xbc] sm:$0xf]
      %v1115 = vld [vmem:[%s3 + $0xc0] sm:$0xf]
      %v1116 = vld [vmem:[%s3 + $0xc4] sm:$0xf]
      %v1117 = vld [vmem:[%s3 + $0xc8] sm:$0xf]
      %v1118 = vld [vmem:[%s3 + $0xcc] sm:$0xf]
      %v1119 = vld [vmem:[%s3 + $0xd0] sm:$0xf]
      %v1120 = vld [vmem:[%s3 + $0xd4] sm:$0xf]
      %v1121 = vld [vmem:[%s3 + $0xd8] sm:$0xf]
      %v1122 = vld [vmem:[%s3 + $0xdc] sm:$0xf]
      %v1123 = vld [vmem:[%s3 + $0xe0] sm:$0xf]
      %v1124 = vld [vmem:[%s3 + $0xe4] sm:$0xf]
      %v1125 = vld [vmem:[%s3 + $0xe8] sm:$0xf]
      %v1126 = vld [vmem:[%s3 + $0xec] sm:$0xf]
      %v1127 = vld [vmem:[%s3 + $0xf0] sm:$0xf]
      %v1128 = vld [vmem:[%s3 + $0xf4] sm:$0xf]
      %v1129 = vld [vmem:[%s3 + $0xf8] sm:$0xf]
      %v1130 = vld [vmem:[%s3 + $0xfc] sm:$0xf]
      %v1131 = vld [vmem:[%s3 + $0x100] sm:$0xf]
      %v1132 = vld [vmem:[%s3 + $0x104] sm:$0xf]
      %v1133 = vld [vmem:[%s3 + $0x108] sm:$0xf]
      %v1134 = vld [vmem:[%s3 + $0x10c] sm:$0xf]
      %v1135 = vld [vmem:[%s3 + $0x110] sm:$0xf]
      %v1136 = vld [vmem:[%s3 + $0x114] sm:$0xf]
      %v1137 = vld [vmem:[%s3 + $0x118] sm:$0xf]
      %v1138 = vld [vmem:[%s3 + $0x11c] sm:$0xf]
      %v1139 = vld [vmem:[%s3 + $0x120] sm:$0xf]
      %v1140 = vld [vmem:[%s3 + $0x124] sm:$0xf]
      %v1141 = vld [vmem:[%s3 + $0x128] sm:$0xf]
      %v1142 = vld [vmem:[%s3 + $0x12c] sm:$0xf]
      %v1143 = vld [vmem:[%s3 + $0x130] sm:$0xf]
      %v1144 = vld [vmem:[%s3 + $0x134] sm:$0xf]
      %v1145 = vld [vmem:[%s3 + $0x138] sm:$0xf]
      %v1146 = vld [vmem:[%s3 + $0x13c] sm:$0xf]
      %v1147 = vld [vmem:[%s3 + $0x140] sm:$0xf]
      %v1148 = vld [vmem:[%s3 + $0x144] sm:$0xf]
      %v1149 = vld [vmem:[%s3 + $0x148] sm:$0xf]
      %v1150 = vld [vmem:[%s3 + $0x14c] sm:$0xf]
      %v1151 = vld [vmem:[%s3 + $0x150] sm:$0xf]
      %v1152 = vld [vmem:[%s3 + $0x154] sm:$0xf]
      %v1153 = vld [vmem:[%s3 + $0x158] sm:$0xf]
      %v1154 = vld [vmem:[%s3 + $0x15c] sm:$0xf]
      %v1155 = vld [vmem:[%s3 + $0x160] sm:$0xf]
      %v1156 = vld [vmem:[%s3 + $0x164] sm:$0xf]
      %v1157 = vld [vmem:[%s3 + $0x168] sm:$0xf]
      %v1158 = vld [vmem:[%s3 + $0x16c] sm:$0xf]
      %v1159 = vld [vmem:[%s3 + $0x170] sm:$0xf]
      %v1160 = vld [vmem:[%s3 + $0x174] sm:$0xf]
      %v1161 = vld [vmem:[%s3 + $0x178] sm:$0xf]
      %v1162 = vld [vmem:[%s3 + $0x17c] sm:$0xf]
      %v1163 = vld [vmem:[%s3 + $0x180] sm:$0xf]
      %v1164 = vld [vmem:[%s3 + $0x184] sm:$0xf]
      %v1165 = vld [vmem:[%s3 + $0x188] sm:$0xf]
      %v1166 = vld [vmem:[%s3 + $0x18c] sm:$0xf]
      %v1167 = vld [vmem:[%s3 + $0x190] sm:$0xf]
      %v1168 = vld [vmem:[%s3 + $0x194] sm:$0xf]
      %v1169 = vld [vmem:[%s3 + $0x198] sm:$0xf]
      %v1170 = vld [vmem:[%s3 + $0x19c] sm:$0xf]
      %v1171 = vld [vmem:[%s3 + $0x1a0] sm:$0xf]
      %v1172 = vld [vmem:[%s3 + $0x1a4] sm:$0xf]
      %v1173 = vld [vmem:[%s3 + $0x1a8] sm:$0xf]
      %v1174 = vld [vmem:[%s3 + $0x1ac] sm:$0xf]
      %v1175 = vld [vmem:[%s3 + $0x1b0] sm:$0xf]
      %v1176 = vld [vmem:[%s3 + $0x1b4] sm:$0xf]
      %v1177 = vld [vmem:[%s3 + $0x1b8] sm:$0xf]
      %v1178 = vld [vmem:[%s3 + $0x1bc] sm:$0xf]
      %v1179 = vld [vmem:[%s3 + $0x1c0] sm:$0xf]
      %v1180 = vld [vmem:[%s3 + $0x1c4] sm:$0xf]
      %v1181 = vld [vmem:[%s3 + $0x1c8] sm:$0xf]
      %v1182 = vld [vmem:[%s3 + $0x1cc] sm:$0xf]
      %v1183 = vld [vmem:[%s3 + $0x1d0] sm:$0xf]
      %v1184 = vld [vmem:[%s3 + $0x1d4] sm:$0xf]
      %v1185 = vld [vmem:[%s3 + $0x1d8] sm:$0xf]
      %v1186 = vld [vmem:[%s3 + $0x1dc] sm:$0xf]
      %v1187 = vld [vmem:[%s3 + $0x1e0] sm:$0xf]
      %v1188 = vld [vmem:[%s3 + $0x1e4] sm:$0xf]
      %v1189 = vld [vmem:[%s3 + $0x1e8] sm:$0xf]
      %v1190 = vld [vmem:[%s3 + $0x1ec] sm:$0xf]
      %v1191 = vld [vmem:[%s3 + $0x1f0] sm:$0xf]
      %v1192 = vld [vmem:[%s3 + $0x1f4] sm:$0xf]
      %v1193 = vld [vmem:[%s3 + $0x1f8] sm:$0xf]
      %v1194 = vld [vmem:[%s3 + $0x1fc] sm:$0xf]
      %v1195 = vld [vmem:[%s3 + $0x200] sm:$0xf]
      %v1196 = vld [vmem:[%s3 + $0x204] sm:$0xf]
      %v1197 = vld [vmem:[%s3 + $0x208] sm:$0xf]
      %v1198 = vld [vmem:[%s3 + $0x20c] sm:$0xf]
      %v1199 = vld [vmem:[%s3 + $0x210] sm:$0xf]
      %v1200 = vld [vmem:[%s3 + $0x214] sm:$0xf]
      %v1201 = vld [vmem:[%s3 + $0x218] sm:$0xf]
      %v1202 = vld [vmem:[%s3 + $0x21c] sm:$0xf]
      %v1203 = vld [vmem:[%s3 + $0x220] sm:$0xf]
      %v1204 = vld [vmem:[%s3 + $0x224] sm:$0xf]
      %v1205 = vld [vmem:[%s3 + $0x228] sm:$0xf]
      %v1206 = vld [vmem:[%s3 + $0x22c] sm:$0xf]
      %v1207 = vld [vmem:[%s3 + $0x230] sm:$0xf]
      %v1208 = vld [vmem:[%s3 + $0x234] sm:$0xf]
      %v1209 = vld [vmem:[%s3 + $0x238] sm:$0xf]
      %v1210 = vld [vmem:[%s3 + $0x23c] sm:$0xf]
      %v1211 = vld [vmem:[%s3 + $0x240] sm:$0xf]
      %v1212 = vld [vmem:[%s3 + $0x244] sm:$0xf]
      %v1213 = vld [vmem:[%s3 + $0x248] sm:$0xf]
      %v1214 = vld [vmem:[%s3 + $0x24c] sm:$0xf]
      %v1215 = vld [vmem:[%s3 + $0x250] sm:$0xf]
      %v1216 = vld [vmem:[%s3 + $0x254] sm:$0xf]
      %v1217 = vld [vmem:[%s3 + $0x258] sm:$0xf]
      %v1218 = vld [vmem:[%s3 + $0x25c] sm:$0xf]
      %v1219 = vld [vmem:[%s3 + $0x260] sm:$0xf]
      %v1220 = vld [vmem:[%s3 + $0x264] sm:$0xf]
      %v1221 = vld [vmem:[%s3 + $0x268] sm:$0xf]
      %v1222 = vld [vmem:[%s3 + $0x26c] sm:$0xf]
      %v1223 = vld [vmem:[%s3 + $0x270] sm:$0xf]
      %v1224 = vld [vmem:[%s3 + $0x274] sm:$0xf]
      %v1225 = vld [vmem:[%s3 + $0x278] sm:$0xf]
      %v1226 = vld [vmem:[%s3 + $0x27c] sm:$0xf]
      %v1227 = vld [vmem:[%s3 + $0x280] sm:$0xf]
      %v1228 = vld [vmem:[%s3 + $0x284] sm:$0xf]
      %v1229 = vld [vmem:[%s3 + $0x288] sm:$0xf]
      %v1230 = vld [vmem:[%s3 + $0x28c] sm:$0xf]
      %v1231 = vld [vmem:[%s3 + $0x290] sm:$0xf]
      %v1232 = vld [vmem:[%s3 + $0x294] sm:$0xf]
      %v1233 = vld [vmem:[%s3 + $0x298] sm:$0xf]
      %v1234 = vld [vmem:[%s3 + $0x29c] sm:$0xf]
      %v1235 = vld [vmem:[%s3 + $0x2a0] sm:$0xf]
      %v1236 = vld [vmem:[%s3 + $0x2a4] sm:$0xf]
      %v1237 = vld [vmem:[%s3 + $0x2a8] sm:$0xf]
      %v1238 = vld [vmem:[%s3 + $0x2ac] sm:$0xf]
      %v1239 = vld [vmem:[%s3 + $0x2b0] sm:$0xf]
      %v1240 = vld [vmem:[%s3 + $0x2b4] sm:$0xf]
      %v1241 = vld [vmem:[%s3 + $0x2b8] sm:$0xf]
      %v1242 = vld [vmem:[%s3 + $0x2bc] sm:$0xf]
      %v1243 = vld [vmem:[%s3 + $0x2c0] sm:$0xf]
      %v1244 = vld [vmem:[%s3 + $0x2c4] sm:$0xf]
      %v1245 = vld [vmem:[%s3 + $0x2c8] sm:$0xf]
      %v1246 = vld [vmem:[%s3 + $0x2cc] sm:$0xf]
      %v1247 = vld [vmem:[%s3 + $0x2d0] sm:$0xf]
      %v1248 = vld [vmem:[%s3 + $0x2d4] sm:$0xf]
      %v1249 = vld [vmem:[%s3 + $0x2d8] sm:$0xf]
      %v1250 = vld [vmem:[%s3 + $0x2dc] sm:$0xf]
      %v1251 = vld [vmem:[%s3 + $0x2e0] sm:$0xf]
      %v1252 = vld [vmem:[%s3 + $0x2e4] sm:$0xf]
      %v1253 = vld [vmem:[%s3 + $0x2e8] sm:$0xf]
      %v1254 = vld [vmem:[%s3 + $0x2ec] sm:$0xf]
      %v1255 = vld [vmem:[%s3 + $0x2f0] sm:$0xf]
      %v1256 = vld [vmem:[%s3 + $0x2f4] sm:$0xf]
      %v1257 = vld [vmem:[%s3 + $0x2f8] sm:$0xf]
      %v1258 = vld [vmem:[%s3 + $0x2fc] sm:$0xf]
      %v1259 = vld [vmem:[%s3 + $0x300] sm:$0xf]
      %v1260 = vld [vmem:[%s3 + $0x304] sm:$0xf]
      %v1261 = vld [vmem:[%s3 + $0x308] sm:$0xf]
      %v1262 = vld [vmem:[%s3 + $0x30c] sm:$0xf]
      %v1263 = vld [vmem:[%s3 + $0x310] sm:$0xf]
      %v1264 = vld [vmem:[%s3 + $0x314] sm:$0xf]
      %v1265 = vld [vmem:[%s3 + $0x318] sm:$0xf]
      %v1266 = vld [vmem:[%s3 + $0x31c] sm:$0xf]
      %v1267 = vld [vmem:[%s3 + $0x320] sm:$0xf]
      %v1268 = vld [vmem:[%s3 + $0x324] sm:$0xf]
      %v1269 = vld [vmem:[%s3 + $0x328] sm:$0xf]
      %v1270 = vld [vmem:[%s3 + $0x32c] sm:$0xf]
      %v1271 = vld [vmem:[%s3 + $0x330] sm:$0xf]
      %v1272 = vld [vmem:[%s3 + $0x334] sm:$0xf]
      %v1273 = vld [vmem:[%s3 + $0x338] sm:$0xf]
      %v1274 = vld [vmem:[%s3 + $0x33c] sm:$0xf]
      %v1275 = vld [vmem:[%s3 + $0x340] sm:$0xf]
      %v1276 = vld [vmem:[%s3 + $0x344] sm:$0xf]
      %v1277 = vld [vmem:[%s3 + $0x348] sm:$0xf]
      %v1278 = vld [vmem:[%s3 + $0x34c] sm:$0xf]
      %v1279 = vld [vmem:[%s3 + $0x350] sm:$0xf]
      %v1280 = vld [vmem:[%s3 + $0x354] sm:$0xf]
      %v1281 = vld [vmem:[%s3 + $0x358] sm:$0xf]
      %v1282 = vld [vmem:[%s3 + $0x35c] sm:$0xf]
      %v1283 = vld [vmem:[%s3 + $0x360] sm:$0xf]
      %v1284 = vld [vmem:[%s3 + $0x364] sm:$0xf]
      %v1285 = vld [vmem:[%s3 + $0x368] sm:$0xf]
      %v1286 = vld [vmem:[%s3 + $0x36c] sm:$0xf]
      %v1287 = vld [vmem:[%s3 + $0x370] sm:$0xf]
      %v1288 = vld [vmem:[%s3 + $0x374] sm:$0xf]
      %v1289 = vld [vmem:[%s3 + $0x378] sm:$0xf]
      %v1290 = vld [vmem:[%s3 + $0x37c] sm:$0xf]
      %v1291 = vld [vmem:[%s3 + $0x380] sm:$0xf]
      %v1292 = vld [vmem:[%s3 + $0x384] sm:$0xf]
      %v1293 = vld [vmem:[%s3 + $0x388] sm:$0xf]
      %v1294 = vld [vmem:[%s3 + $0x38c] sm:$0xf]
      %v1295 = vld [vmem:[%s3 + $0x390] sm:$0xf]
      %v1296 = vld [vmem:[%s3 + $0x394] sm:$0xf]
      %v1297 = vld [vmem:[%s3 + $0x398] sm:$0xf]
      %v1298 = vld [vmem:[%s3 + $0x39c] sm:$0xf]
      %v1299 = vld [vmem:[%s3 + $0x3a0] sm:$0xf]
      %v1300 = vld [vmem:[%s3 + $0x3a4] sm:$0xf]
      %v1301 = vld [vmem:[%s3 + $0x3a8] sm:$0xf]
      %v1302 = vld [vmem:[%s3 + $0x3ac] sm:$0xf]
      %v1303 = vld [vmem:[%s3 + $0x3b0] sm:$0xf]
      %v1304 = vld [vmem:[%s3 + $0x3b4] sm:$0xf]
      %v1305 = vld [vmem:[%s3 + $0x3b8] sm:$0xf]
      %v1306 = vld [vmem:[%s3 + $0x3bc] sm:$0xf]
      %v1307 = vld [vmem:[%s3 + $0x3c0] sm:$0xf]
      %v1308 = vld [vmem:[%s3 + $0x3c4] sm:$0xf]
      %v1309 = vld [vmem:[%s3 + $0x3c8] sm:$0xf]
      %v1310 = vld [vmem:[%s3 + $0x3cc] sm:$0xf]
      %v1311 = vld [vmem:[%s3 + $0x3d0] sm:$0xf]
      %v1312 = vld [vmem:[%s3 + $0x3d4] sm:$0xf]
      %v1313 = vld [vmem:[%s3 + $0x3d8] sm:$0xf]
      %v1314 = vld [vmem:[%s3 + $0x3dc] sm:$0xf]
      %v1315 = vld [vmem:[%s3 + $0x3e0] sm:$0xf]
      %v1316 = vld [vmem:[%s3 + $0x3e4] sm:$0xf]
      %v1317 = vld [vmem:[%s3 + $0x3e8] sm:$0xf]
      %v1318 = vld [vmem:[%s3 + $0x3ec] sm:$0xf]
      %v1319 = vld [vmem:[%s3 + $0x3f0] sm:$0xf]
      %v1320 = vld [vmem:[%s3 + $0x3f4] sm:$0xf]
      %v1321 = vld [vmem:[%s3 + $0x3f8] sm:$0xf]
      %v1322 = vld [vmem:[%s3 + $0x3fc] sm:$0xf]
      %v1323 = vld [vmem:[%s4] sm:$0x1]
      %v1325 = vlaneseq
      %v1326 = vshrl.u32 %v1325, 7
      %v1327 = vsub.s32 0, %v1326
      %v1328 = vrot.slane %v1323, %v1327
      %v1586 = vunpack.c.l.b16 %v1067
      %v1587 = vunpack.c.l.b16 %v1068
      %v1588 = vunpack.c.l.b16 %v1069
      %v1589 = vunpack.c.l.b16 %v1070
      %v1590 = vunpack.c.l.b16 %v1071
      %v1591 = vunpack.c.l.b16 %v1072
      %v1592 = vunpack.c.l.b16 %v1073
      %v1593 = vunpack.c.l.b16 %v1074
      %v1594 = vunpack.c.l.b16 %v1075
      %v1595 = vunpack.c.l.b16 %v1076
      %v1596 = vunpack.c.l.b16 %v1077
      %v1597 = vunpack.c.l.b16 %v1078
      %v1598 = vunpack.c.l.b16 %v1079
      %v1599 = vunpack.c.l.b16 %v1080
      %v1600 = vunpack.c.l.b16 %v1081
      %v1601 = vunpack.c.l.b16 %v1082
      %v1602 = vunpack.c.l.b16 %v1083
      %v1603 = vunpack.c.l.b16 %v1084
      %v1604 = vunpack.c.l.b16 %v1085
      %v1605 = vunpack.c.l.b16 %v1086
      %v1606 = vunpack.c.l.b16 %v1087
      %v1607 = vunpack.c.l.b16 %v1088
      %v1608 = vunpack.c.l.b16 %v1089
      %v1609 = vunpack.c.l.b16 %v1090
      %v1610 = vunpack.c.l.b16 %v1091
      %v1611 = vunpack.c.l.b16 %v1092
      %v1612 = vunpack.c.l.b16 %v1093
      %v1613 = vunpack.c.l.b16 %v1094
      %v1614 = vunpack.c.l.b16 %v1095
      %v1615 = vunpack.c.l.b16 %v1096
      %v1616 = vunpack.c.l.b16 %v1097
      %v1617 = vunpack.c.l.b16 %v1098
      %v1618 = vunpack.c.l.b16 %v1099
      %v1619 = vunpack.c.l.b16 %v1100
      %v1620 = vunpack.c.l.b16 %v1101
      %v1621 = vunpack.c.l.b16 %v1102
      %v1622 = vunpack.c.l.b16 %v1103
      %v1623 = vunpack.c.l.b16 %v1104
      %v1624 = vunpack.c.l.b16 %v1105
      %v1625 = vunpack.c.l.b16 %v1106
      %v1626 = vunpack.c.l.b16 %v1107
      %v1627 = vunpack.c.l.b16 %v1108
      %v1628 = vunpack.c.l.b16 %v1109
      %v1629 = vunpack.c.l.b16 %v1110
      %v1630 = vunpack.c.l.b16 %v1111
      %v1631 = vunpack.c.l.b16 %v1112
      %v1632 = vunpack.c.l.b16 %v1113
      %v1633 = vunpack.c.l.b16 %v1114
      %v1634 = vunpack.c.l.b16 %v1115
      %v1635 = vunpack.c.l.b16 %v1116
      %v1636 = vunpack.c.l.b16 %v1117
      %v1637 = vunpack.c.l.b16 %v1118
      %v1638 = vunpack.c.l.b16 %v1119
      %v1639 = vunpack.c.l.b16 %v1120
      %v1640 = vunpack.c.l.b16 %v1121
      %v1641 = vunpack.c.l.b16 %v1122
      %v1642 = vunpack.c.l.b16 %v1123
      %v1643 = vunpack.c.l.b16 %v1124
      %v1644 = vunpack.c.l.b16 %v1125
      %v1645 = vunpack.c.l.b16 %v1126
      %v1646 = vunpack.c.l.b16 %v1127
      %v1647 = vunpack.c.l.b16 %v1128
      %v1648 = vunpack.c.l.b16 %v1129
      %v1649 = vunpack.c.l.b16 %v1130
      %v1650 = vunpack.c.l.b16 %v1131
      %v1651 = vunpack.c.l.b16 %v1132
      %v1652 = vunpack.c.l.b16 %v1133
      %v1653 = vunpack.c.l.b16 %v1134
      %v1654 = vunpack.c.l.b16 %v1135
      %v1655 = vunpack.c.l.b16 %v1136
      %v1656 = vunpack.c.l.b16 %v1137
      %v1657 = vunpack.c.l.b16 %v1138
      %v1658 = vunpack.c.l.b16 %v1139
      %v1659 = vunpack.c.l.b16 %v1140
      %v1660 = vunpack.c.l.b16 %v1141
      %v1661 = vunpack.c.l.b16 %v1142
      %v1662 = vunpack.c.l.b16 %v1143
      %v1663 = vunpack.c.l.b16 %v1144
      %v1664 = vunpack.c.l.b16 %v1145
      %v1665 = vunpack.c.l.b16 %v1146
      %v1666 = vunpack.c.l.b16 %v1147
      %v1667 = vunpack.c.l.b16 %v1148
      %v1668 = vunpack.c.l.b16 %v1149
      %v1669 = vunpack.c.l.b16 %v1150
      %v1670 = vunpack.c.l.b16 %v1151
      %v1671 = vunpack.c.l.b16 %v1152
      %v1672 = vunpack.c.l.b16 %v1153
      %v1673 = vunpack.c.l.b16 %v1154
      %v1674 = vunpack.c.l.b16 %v1155
      %v1675 = vunpack.c.l.b16 %v1156
      %v1676 = vunpack.c.l.b16 %v1157
      %v1677 = vunpack.c.l.b16 %v1158
      %v1678 = vunpack.c.l.b16 %v1159
      %v1679 = vunpack.c.l.b16 %v1160
      %v1680 = vunpack.c.l.b16 %v1161
      %v1681 = vunpack.c.l.b16 %v1162
      %v1682 = vunpack.c.l.b16 %v1163
      %v1683 = vunpack.c.l.b16 %v1164
      %v1684 = vunpack.c.l.b16 %v1165
      %v1685 = vunpack.c.l.b16 %v1166
      %v1686 = vunpack.c.l.b16 %v1167
      %v1687 = vunpack.c.l.b16 %v1168
      %v1688 = vunpack.c.l.b16 %v1169
      %v1689 = vunpack.c.l.b16 %v1170
      %v1690 = vunpack.c.l.b16 %v1171
      %v1691 = vunpack.c.l.b16 %v1172
      %v1692 = vunpack.c.l.b16 %v1173
      %v1693 = vunpack.c.l.b16 %v1174
      %v1694 = vunpack.c.l.b16 %v1175
      %v1695 = vunpack.c.l.b16 %v1176
      %v1696 = vunpack.c.l.b16 %v1177
      %v1697 = vunpack.c.l.b16 %v1178
      %v1698 = vunpack.c.l.b16 %v1179
      %v1699 = vunpack.c.l.b16 %v1180
      %v1700 = vunpack.c.l.b16 %v1181
      %v1701 = vunpack.c.l.b16 %v1182
      %v1702 = vunpack.c.l.b16 %v1183
      %v1703 = vunpack.c.l.b16 %v1184
      %v1704 = vunpack.c.l.b16 %v1185
      %v1705 = vunpack.c.l.b16 %v1186
      %v1706 = vunpack.c.l.b16 %v1187
      %v1707 = vunpack.c.l.b16 %v1188
      %v1708 = vunpack.c.l.b16 %v1189
      %v1709 = vunpack.c.l.b16 %v1190
      %v1710 = vunpack.c.l.b16 %v1191
      %v1711 = vunpack.c.l.b16 %v1192
      %v1712 = vunpack.c.l.b16 %v1193
      %v1713 = vunpack.c.l.b16 %v1194
      %v1714 = vunpack.c.l.b16 %v1195
      %v1715 = vunpack.c.l.b16 %v1196
      %v1716 = vunpack.c.l.b16 %v1197
      %v1717 = vunpack.c.l.b16 %v1198
      %v1718 = vunpack.c.l.b16 %v1199
      %v1719 = vunpack.c.l.b16 %v1200
      %v1720 = vunpack.c.l.b16 %v1201
      %v1721 = vunpack.c.l.b16 %v1202
      %v1722 = vunpack.c.l.b16 %v1203
      %v1723 = vunpack.c.l.b16 %v1204
      %v1724 = vunpack.c.l.b16 %v1205
      %v1725 = vunpack.c.l.b16 %v1206
      %v1726 = vunpack.c.l.b16 %v1207
      %v1727 = vunpack.c.l.b16 %v1208
      %v1728 = vunpack.c.l.b16 %v1209
      %v1729 = vunpack.c.l.b16 %v1210
      %v1730 = vunpack.c.l.b16 %v1211
      %v1731 = vunpack.c.l.b16 %v1212
      %v1732 = vunpack.c.l.b16 %v1213
      %v1733 = vunpack.c.l.b16 %v1214
      %v1734 = vunpack.c.l.b16 %v1215
      %v1735 = vunpack.c.l.b16 %v1216
      %v1736 = vunpack.c.l.b16 %v1217
      %v1737 = vunpack.c.l.b16 %v1218
      %v1738 = vunpack.c.l.b16 %v1219
      %v1739 = vunpack.c.l.b16 %v1220
      %v1740 = vunpack.c.l.b16 %v1221
      %v1741 = vunpack.c.l.b16 %v1222
      %v1742 = vunpack.c.l.b16 %v1223
      %v1743 = vunpack.c.l.b16 %v1224
      %v1744 = vunpack.c.l.b16 %v1225
      %v1745 = vunpack.c.l.b16 %v1226
      %v1746 = vunpack.c.l.b16 %v1227
      %v1747 = vunpack.c.l.b16 %v1228
      %v1748 = vunpack.c.l.b16 %v1229
      %v1749 = vunpack.c.l.b16 %v1230
      %v1750 = vunpack.c.l.b16 %v1231
      %v1751 = vunpack.c.l.b16 %v1232
      %v1752 = vunpack.c.l.b16 %v1233
      %v1753 = vunpack.c.l.b16 %v1234
      %v1754 = vunpack.c.l.b16 %v1235
      %v1755 = vunpack.c.l.b16 %v1236
      %v1756 = vunpack.c.l.b16 %v1237
      %v1757 = vunpack.c.l.b16 %v1238
      %v1758 = vunpack.c.l.b16 %v1239
      %v1759 = vunpack.c.l.b16 %v1240
      %v1760 = vunpack.c.l.b16 %v1241
      %v1761 = vunpack.c.l.b16 %v1242
      %v1762 = vunpack.c.l.b16 %v1243
      %v1763 = vunpack.c.l.b16 %v1244
      %v1764 = vunpack.c.l.b16 %v1245
      %v1765 = vunpack.c.l.b16 %v1246
      %v1766 = vunpack.c.l.b16 %v1247
      %v1767 = vunpack.c.l.b16 %v1248
      %v1768 = vunpack.c.l.b16 %v1249
      %v1769 = vunpack.c.l.b16 %v1250
      %v1770 = vunpack.c.l.b16 %v1251
      %v1771 = vunpack.c.l.b16 %v1252
      %v1772 = vunpack.c.l.b16 %v1253
      %v1773 = vunpack.c.l.b16 %v1254
      %v1774 = vunpack.c.l.b16 %v1255
      %v1775 = vunpack.c.l.b16 %v1256
      %v1776 = vunpack.c.l.b16 %v1257
      %v1777 = vunpack.c.l.b16 %v1258
      %v1778 = vunpack.c.l.b16 %v1259
      %v1779 = vunpack.c.l.b16 %v1260
      %v1780 = vunpack.c.l.b16 %v1261
      %v1781 = vunpack.c.l.b16 %v1262
      %v1782 = vunpack.c.l.b16 %v1263
      %v1783 = vunpack.c.l.b16 %v1264
      %v1784 = vunpack.c.l.b16 %v1265
      %v1785 = vunpack.c.l.b16 %v1266
      %v1786 = vunpack.c.l.b16 %v1267
      %v1787 = vunpack.c.l.b16 %v1268
      %v1788 = vunpack.c.l.b16 %v1269
      %v1789 = vunpack.c.l.b16 %v1270
      %v1790 = vunpack.c.l.b16 %v1271
      %v1791 = vunpack.c.l.b16 %v1272
      %v1792 = vunpack.c.l.b16 %v1273
      %v1793 = vunpack.c.l.b16 %v1274
      %v1794 = vunpack.c.l.b16 %v1275
      %v1795 = vunpack.c.l.b16 %v1276
      %v1796 = vunpack.c.l.b16 %v1277
      %v1797 = vunpack.c.l.b16 %v1278
      %v1798 = vunpack.c.l.b16 %v1279
      %v1799 = vunpack.c.l.b16 %v1280
      %v1800 = vunpack.c.l.b16 %v1281
      %v1801 = vunpack.c.l.b16 %v1282
      %v1802 = vunpack.c.l.b16 %v1283
      %v1803 = vunpack.c.l.b16 %v1284
      %v1804 = vunpack.c.l.b16 %v1285
      %v1805 = vunpack.c.l.b16 %v1286
      %v1806 = vunpack.c.l.b16 %v1287
      %v1807 = vunpack.c.l.b16 %v1288
      %v1808 = vunpack.c.l.b16 %v1289
      %v1809 = vunpack.c.l.b16 %v1290
      %v1810 = vunpack.c.l.b16 %v1291
      %v1811 = vunpack.c.l.b16 %v1292
      %v1812 = vunpack.c.l.b16 %v1293
      %v1813 = vunpack.c.l.b16 %v1294
      %v1814 = vunpack.c.l.b16 %v1295
      %v1815 = vunpack.c.l.b16 %v1296
      %v1816 = vunpack.c.l.b16 %v1297
      %v1817 = vunpack.c.l.b16 %v1298
      %v1818 = vunpack.c.l.b16 %v1299
      %v1819 = vunpack.c.l.b16 %v1300
      %v1820 = vunpack.c.l.b16 %v1301
      %v1821 = vunpack.c.l.b16 %v1302
      %v1822 = vunpack.c.l.b16 %v1303
      %v1823 = vunpack.c.l.b16 %v1304
      %v1824 = vunpack.c.l.b16 %v1305
      %v1825 = vunpack.c.l.b16 %v1306
      %v1826 = vunpack.c.l.b16 %v1307
      %v1827 = vunpack.c.l.b16 %v1308
      %v1828 = vunpack.c.l.b16 %v1309
      %v1829 = vunpack.c.l.b16 %v1310
      %v1830 = vunpack.c.l.b16 %v1311
      %v1831 = vunpack.c.l.b16 %v1312
      %v1832 = vunpack.c.l.b16 %v1313
      %v1833 = vunpack.c.l.b16 %v1314
      %v1834 = vunpack.c.l.b16 %v1315
      %v1835 = vunpack.c.l.b16 %v1316
      %v1836 = vunpack.c.l.b16 %v1317
      %v1837 = vunpack.c.l.b16 %v1318
      %v1838 = vunpack.c.l.b16 %v1319
      %v1839 = vunpack.c.l.b16 %v1320
      %v1840 = vunpack.c.l.b16 %v1321
      %v1841 = vunpack.c.l.b16 %v1322
      %v1842 = vpack.c.b16 %v1587, %v1586
      %v1843 = vpack.c.b16 %v1589, %v1588
      %v1844 = vpack.c.b16 %v1591, %v1590
      %v1845 = vpack.c.b16 %v1593, %v1592
      %v1846 = vpack.c.b16 %v1595, %v1594
      %v1847 = vpack.c.b16 %v1597, %v1596
      %v1848 = vpack.c.b16 %v1599, %v1598
      %v1849 = vpack.c.b16 %v1601, %v1600
      %v1850 = vpack.c.b16 %v1603, %v1602
      %v1851 = vpack.c.b16 %v1605, %v1604
      %v1852 = vpack.c.b16 %v1607, %v1606
      %v1853 = vpack.c.b16 %v1609, %v1608
      %v1854 = vpack.c.b16 %v1611, %v1610
      %v1855 = vpack.c.b16 %v1613, %v1612
      %v1856 = vpack.c.b16 %v1615, %v1614
      %v1857 = vpack.c.b16 %v1617, %v1616
      %v1858 = vpack.c.b16 %v1619, %v1618
      %v1859 = vpack.c.b16 %v1621, %v1620
      %v1860 = vpack.c.b16 %v1623, %v1622
      %v1861 = vpack.c.b16 %v1625, %v1624
      %v1862 = vpack.c.b16 %v1627, %v1626
      %v1863 = vpack.c.b16 %v1629, %v1628
      %v1864 = vpack.c.b16 %v1631, %v1630
      %v1865 = vpack.c.b16 %v1633, %v1632
      %v1866 = vpack.c.b16 %v1635, %v1634
      %v1867 = vpack.c.b16 %v1637, %v1636
      %v1868 = vpack.c.b16 %v1639, %v1638
      %v1869 = vpack.c.b16 %v1641, %v1640
      %v1870 = vpack.c.b16 %v1643, %v1642
      %v1871 = vpack.c.b16 %v1645, %v1644
      %v1872 = vpack.c.b16 %v1647, %v1646
      %v1873 = vpack.c.b16 %v1649, %v1648
      %v1874 = vpack.c.b16 %v1651, %v1650
      %v1875 = vpack.c.b16 %v1653, %v1652
      %v1876 = vpack.c.b16 %v1655, %v1654
      %v1877 = vpack.c.b16 %v1657, %v1656
      %v1878 = vpack.c.b16 %v1659, %v1658
      %v1879 = vpack.c.b16 %v1661, %v1660
      %v1880 = vpack.c.b16 %v1663, %v1662
      %v1881 = vpack.c.b16 %v1665, %v1664
      %v1882 = vpack.c.b16 %v1667, %v1666
      %v1883 = vpack.c.b16 %v1669, %v1668
      %v1884 = vpack.c.b16 %v1671, %v1670
      %v1885 = vpack.c.b16 %v1673, %v1672
      %v1886 = vpack.c.b16 %v1675, %v1674
      %v1887 = vpack.c.b16 %v1677, %v1676
      %v1888 = vpack.c.b16 %v1679, %v1678
      %v1889 = vpack.c.b16 %v1681, %v1680
      %v1890 = vpack.c.b16 %v1683, %v1682
      %v1891 = vpack.c.b16 %v1685, %v1684
      %v1892 = vpack.c.b16 %v1687, %v1686
      %v1893 = vpack.c.b16 %v1689, %v1688
      %v1894 = vpack.c.b16 %v1691, %v1690
      %v1895 = vpack.c.b16 %v1693, %v1692
      %v1896 = vpack.c.b16 %v1695, %v1694
      %v1897 = vpack.c.b16 %v1697, %v1696
      %v1898 = vpack.c.b16 %v1699, %v1698
      %v1899 = vpack.c.b16 %v1701, %v1700
      %v1900 = vpack.c.b16 %v1703, %v1702
      %v1901 = vpack.c.b16 %v1705, %v1704
      %v1902 = vpack.c.b16 %v1707, %v1706
      %v1903 = vpack.c.b16 %v1709, %v1708
      %v1904 = vpack.c.b16 %v1711, %v1710
      %v1905 = vpack.c.b16 %v1713, %v1712
      %v1906 = vpack.c.b16 %v1715, %v1714
      %v1907 = vpack.c.b16 %v1717, %v1716
      %v1908 = vpack.c.b16 %v1719, %v1718
      %v1909 = vpack.c.b16 %v1721, %v1720
      %v1910 = vpack.c.b16 %v1723, %v1722
      %v1911 = vpack.c.b16 %v1725, %v1724
      %v1912 = vpack.c.b16 %v1727, %v1726
      %v1913 = vpack.c.b16 %v1729, %v1728
      %v1914 = vpack.c.b16 %v1731, %v1730
      %v1915 = vpack.c.b16 %v1733, %v1732
      %v1916 = vpack.c.b16 %v1735, %v1734
      %v1917 = vpack.c.b16 %v1737, %v1736
      %v1918 = vpack.c.b16 %v1739, %v1738
      %v1919 = vpack.c.b16 %v1741, %v1740
      %v1920 = vpack.c.b16 %v1743, %v1742
      %v1921 = vpack.c.b16 %v1745, %v1744
      %v1922 = vpack.c.b16 %v1747, %v1746
      %v1923 = vpack.c.b16 %v1749, %v1748
      %v1924 = vpack.c.b16 %v1751, %v1750
      %v1925 = vpack.c.b16 %v1753, %v1752
      %v1926 = vpack.c.b16 %v1755, %v1754
      %v1927 = vpack.c.b16 %v1757, %v1756
      %v1928 = vpack.c.b16 %v1759, %v1758
      %v1929 = vpack.c.b16 %v1761, %v1760
      %v1930 = vpack.c.b16 %v1763, %v1762
      %v1931 = vpack.c.b16 %v1765, %v1764
      %v1932 = vpack.c.b16 %v1767, %v1766
      %v1933 = vpack.c.b16 %v1769, %v1768
      %v1934 = vpack.c.b16 %v1771, %v1770
      %v1935 = vpack.c.b16 %v1773, %v1772
      %v1936 = vpack.c.b16 %v1775, %v1774
      %v1937 = vpack.c.b16 %v1777, %v1776
      %v1938 = vpack.c.b16 %v1779, %v1778
      %v1939 = vpack.c.b16 %v1781, %v1780
      %v1940 = vpack.c.b16 %v1783, %v1782
      %v1941 = vpack.c.b16 %v1785, %v1784
      %v1942 = vpack.c.b16 %v1787, %v1786
      %v1943 = vpack.c.b16 %v1789, %v1788
      %v1944 = vpack.c.b16 %v1791, %v1790
      %v1945 = vpack.c.b16 %v1793, %v1792
      %v1946 = vpack.c.b16 %v1795, %v1794
      %v1947 = vpack.c.b16 %v1797, %v1796
      %v1948 = vpack.c.b16 %v1799, %v1798
      %v1949 = vpack.c.b16 %v1801, %v1800
      %v1950 = vpack.c.b16 %v1803, %v1802
      %v1951 = vpack.c.b16 %v1805, %v1804
      %v1952 = vpack.c.b16 %v1807, %v1806
      %v1953 = vpack.c.b16 %v1809, %v1808
      %v1954 = vpack.c.b16 %v1811, %v1810
      %v1955 = vpack.c.b16 %v1813, %v1812
      %v1956 = vpack.c.b16 %v1815, %v1814
      %v1957 = vpack.c.b16 %v1817, %v1816
      %v1958 = vpack.c.b16 %v1819, %v1818
      %v1959 = vpack.c.b16 %v1821, %v1820
      %v1960 = vpack.c.b16 %v1823, %v1822
      %v1961 = vpack.c.b16 %v1825, %v1824
      %v1962 = vpack.c.b16 %v1827, %v1826
      %v1963 = vpack.c.b16 %v1829, %v1828
      %v1964 = vpack.c.b16 %v1831, %v1830
      %v1965 = vpack.c.b16 %v1833, %v1832
      %v1966 = vpack.c.b16 %v1835, %v1834
      %v1967 = vpack.c.b16 %v1837, %v1836
      %v1968 = vpack.c.b16 %v1839, %v1838
      %v1969 = vpack.c.b16 %v1841, %v1840
      %2098 = vmatprep.subr.bf16.mxu0 0
      %2099 = vmatpush1.bf16.msra.mxu0 %v1842
      %2100 = vmatprep.subr.bf16.mxu0 0
      %2101 = vmatpush1.bf16.msra.mxu0 %v1843
      %2102 = vmatprep.subr.bf16.mxu0 0
      %2103 = vmatpush1.bf16.msra.mxu0 %v1844
      %2104 = vmatprep.subr.bf16.mxu0 0
      %2105 = vmatpush1.bf16.msra.mxu0 %v1845
      %2106 = vmatprep.subr.bf16.mxu0 0
      %2107 = vmatpush1.bf16.msra.mxu0 %v1846
      %2108 = vmatprep.subr.bf16.mxu0 0
      %2109 = vmatpush1.bf16.msra.mxu0 %v1847
      %2110 = vmatprep.subr.bf16.mxu0 0
      %2111 = vmatpush1.bf16.msra.mxu0 %v1848
      %2112 = vmatprep.subr.bf16.mxu0 0
      %2113 = vmatpush1.bf16.msra.mxu0 %v1849
      %2114 = vmatprep.subr.bf16.mxu0 0
      %2115 = vmatpush1.bf16.msra.mxu0 %v1850
      %2116 = vmatprep.subr.bf16.mxu0 0
      %2117 = vmatpush1.bf16.msra.mxu0 %v1851
      %2118 = vmatprep.subr.bf16.mxu0 0
      %2119 = vmatpush1.bf16.msra.mxu0 %v1852
      %2120 = vmatprep.subr.bf16.mxu0 0
      %2121 = vmatpush1.bf16.msra.mxu0 %v1853
      %2122 = vmatprep.subr.bf16.mxu0 0
      %2123 = vmatpush1.bf16.msra.mxu0 %v1854
      %2124 = vmatprep.subr.bf16.mxu0 0
      %2125 = vmatpush1.bf16.msra.mxu0 %v1855
      %2126 = vmatprep.subr.bf16.mxu0 0
      %2127 = vmatpush1.bf16.msra.mxu0 %v1856
      %2128 = vmatprep.subr.bf16.mxu0 0
      %2129 = vmatpush1.bf16.msra.mxu0 %v1857
      %2130 = vmatprep.mubr.bf16.mxu0 %v1052
      %2131 = vmatmul.mubr.bf16.gmra.mrb[0].mxu0 %v1051
      %v2132 = vpop.f32.mrb[0].mxu0
      %v2133 = vadd.f32 %v1328, %v2132
      %v2134 = vpop.f32.mrb[0].mxu0
      %v2135 = vpop.f32.mrb[0].mxu0
      %v2136 = vadd.f32 %v1328, %v2135
      %v2137 = vpop.f32.mrb[0].mxu0
      %2138 = vdwg.mxu0
      %2139 = vmatprep.subr.bf16.mxu0 0
      %2140 = vmatpush1.bf16.msra.mxu0 %v1858
      %2141 = vmatprep.subr.bf16.mxu0 0
      %2142 = vmatpush1.bf16.msra.mxu0 %v1859
      %2143 = vmatprep.subr.bf16.mxu0 0
      %2144 = vmatpush1.bf16.msra.mxu0 %v1860
      %2145 = vmatprep.subr.bf16.mxu0 0
      %2146 = vmatpush1.bf16.msra.mxu0 %v1861
      %2147 = vmatprep.subr.bf16.mxu0 0
      %2148 = vmatpush1.bf16.msra.mxu0 %v1862
      %2149 = vmatprep.subr.bf16.mxu0 0
      %2150 = vmatpush1.bf16.msra.mxu0 %v1863
      %2151 = vmatprep.subr.bf16.mxu0 0
      %2152 = vmatpush1.bf16.msra.mxu0 %v1864
      %2153 = vmatprep.subr.bf16.mxu0 0
      %2154 = vmatpush1.bf16.msra.mxu0 %v1865
      %2155 = vmatprep.subr.bf16.mxu0 0
      %2156 = vmatpush1.bf16.msra.mxu0 %v1866
      %2157 = vmatprep.subr.bf16.mxu0 0
      %2158 = vmatpush1.bf16.msra.mxu0 %v1867
      %2159 = vmatprep.subr.bf16.mxu0 0
      %2160 = vmatpush1.bf16.msra.mxu0 %v1868
      %2161 = vmatprep.subr.bf16.mxu0 0
      %2162 = vmatpush1.bf16.msra.mxu0 %v1869
      %2163 = vmatprep.subr.bf16.mxu0 0
      %2164 = vmatpush1.bf16.msra.mxu0 %v1870
      %2165 = vmatprep.subr.bf16.mxu0 0
      %2166 = vmatpush1.bf16.msra.mxu0 %v1871
      %2167 = vmatprep.subr.bf16.mxu0 0
      %2168 = vmatpush1.bf16.msra.mxu0 %v1872
      %2169 = vmatprep.subr.bf16.mxu0 0
      %2170 = vmatpush1.bf16.msra.mxu0 %v1873
      %2171 = vmatprep.mubr.bf16.mxu0 %v1054
      %2172 = vmatmul.mubr.bf16.gmra.mrb[0].mxu0 %v1053
      %v2173 = vpop.f32.mrb[0].mxu0
      %v2174 = vadd.f32 %v2133, %v2173
      %v2175 = vpop.f32.mrb[0].mxu0
      %v2176 = vpop.f32.mrb[0].mxu0
      %v2177 = vadd.f32 %v2136, %v2176
      %v2178 = vpop.f32.mrb[0].mxu0
      %2179 = vdwg.mxu0
      %2180 = vmatprep.subr.bf16.mxu0 0
      %2181 = vmatpush1.bf16.msra.mxu0 %v1874
      %2182 = vmatprep.subr.bf16.mxu0 0
      %2183 = vmatpush1.bf16.msra.mxu0 %v1875
      %2184 = vmatprep.subr.bf16.mxu0 0
      %2185 = vmatpush1.bf16.msra.mxu0 %v1876
      %2186 = vmatprep.subr.bf16.mxu0 0
      %2187 = vmatpush1.bf16.msra.mxu0 %v1877
      %2188 = vmatprep.subr.bf16.mxu0 0
      %2189 = vmatpush1.bf16.msra.mxu0 %v1878
      %2190 = vmatprep.subr.bf16.mxu0 0
      %2191 = vmatpush1.bf16.msra.mxu0 %v1879
      %2192 = vmatprep.subr.bf16.mxu0 0
      %2193 = vmatpush1.bf16.msra.mxu0 %v1880
      %2194 = vmatprep.subr.bf16.mxu0 0
      %2195 = vmatpush1.bf16.msra.mxu0 %v1881
      %2196 = vmatprep.subr.bf16.mxu0 0
      %2197 = vmatpush1.bf16.msra.mxu0 %v1882
      %2198 = vmatprep.subr.bf16.mxu0 0
      %2199 = vmatpush1.bf16.msra.mxu0 %v1883
      %2200 = vmatprep.subr.bf16.mxu0 0
      %2201 = vmatpush1.bf16.msra.mxu0 %v1884
      %2202 = vmatprep.subr.bf16.mxu0 0
      %2203 = vmatpush1.bf16.msra.mxu0 %v1885
      %2204 = vmatprep.subr.bf16.mxu0 0
      %2205 = vmatpush1.bf16.msra.mxu0 %v1886
      %2206 = vmatprep.subr.bf16.mxu0 0
      %2207 = vmatpush1.bf16.msra.mxu0 %v1887
      %2208 = vmatprep.subr.bf16.mxu0 0
      %2209 = vmatpush1.bf16.msra.mxu0 %v1888
      %2210 = vmatprep.subr.bf16.mxu0 0
      %2211 = vmatpush1.bf16.msra.mxu0 %v1889
      %2212 = vmatprep.mubr.bf16.mxu0 %v1056
      %2213 = vmatmul.mubr.bf16.gmra.mrb[0].mxu0 %v1055
      %v2214 = vpop.f32.mrb[0].mxu0
      %v2215 = vadd.f32 %v2174, %v2214
      %v2216 = vpop.f32.mrb[0].mxu0
      %v2217 = vpop.f32.mrb[0].mxu0
      %v2218 = vadd.f32 %v2177, %v2217
      %v2219 = vpop.f32.mrb[0].mxu0
      %2220 = vdwg.mxu0
      %2221 = vmatprep.subr.bf16.mxu0 0
      %2222 = vmatpush1.bf16.msra.mxu0 %v1890
      %2223 = vmatprep.subr.bf16.mxu0 0
      %2224 = vmatpush1.bf16.msra.mxu0 %v1891
      %2225 = vmatprep.subr.bf16.mxu0 0
      %2226 = vmatpush1.bf16.msra.mxu0 %v1892
      %2227 = vmatprep.subr.bf16.mxu0 0
      %2228 = vmatpush1.bf16.msra.mxu0 %v1893
      %2229 = vmatprep.subr.bf16.mxu0 0
      %2230 = vmatpush1.bf16.msra.mxu0 %v1894
      %2231 = vmatprep.subr.bf16.mxu0 0
      %2232 = vmatpush1.bf16.msra.mxu0 %v1895
      %2233 = vmatprep.subr.bf16.mxu0 0
      %2234 = vmatpush1.bf16.msra.mxu0 %v1896
      %2235 = vmatprep.subr.bf16.mxu0 0
      %2236 = vmatpush1.bf16.msra.mxu0 %v1897
      %2237 = vmatprep.subr.bf16.mxu0 0
      %2238 = vmatpush1.bf16.msra.mxu0 %v1898
      %2239 = vmatprep.subr.bf16.mxu0 0
      %2240 = vmatpush1.bf16.msra.mxu0 %v1899
      %2241 = vmatprep.subr.bf16.mxu0 0
      %2242 = vmatpush1.bf16.msra.mxu0 %v1900
      %2243 = vmatprep.subr.bf16.mxu0 0
      %2244 = vmatpush1.bf16.msra.mxu0 %v1901
      %2245 = vmatprep.subr.bf16.mxu0 0
      %2246 = vmatpush1.bf16.msra.mxu0 %v1902
      %2247 = vmatprep.subr.bf16.mxu0 0
      %2248 = vmatpush1.bf16.msra.mxu0 %v1903
      %2249 = vmatprep.subr.bf16.mxu0 0
      %2250 = vmatpush1.bf16.msra.mxu0 %v1904
      %2251 = vmatprep.subr.bf16.mxu0 0
      %2252 = vmatpush1.bf16.msra.mxu0 %v1905
      %2253 = vmatprep.mubr.bf16.mxu0 %v1058
      %2254 = vmatmul.mubr.bf16.gmra.mrb[0].mxu0 %v1057
      %v2255 = vpop.f32.mrb[0].mxu0
      %v2256 = vadd.f32 %v2215, %v2255
      %v2257 = vpop.f32.mrb[0].mxu0
      %v2258 = vpop.f32.mrb[0].mxu0
      %v2259 = vadd.f32 %v2218, %v2258
      %v2260 = vpop.f32.mrb[0].mxu0
      %2261 = vdwg.mxu0
      %2262 = vmatprep.subr.bf16.mxu0 0
      %2263 = vmatpush1.bf16.msra.mxu0 %v1906
      %2264 = vmatprep.subr.bf16.mxu0 0
      %2265 = vmatpush1.bf16.msra.mxu0 %v1907
      %2266 = vmatprep.subr.bf16.mxu0 0
      %2267 = vmatpush1.bf16.msra.mxu0 %v1908
      %2268 = vmatprep.subr.bf16.mxu0 0
      %2269 = vmatpush1.bf16.msra.mxu0 %v1909
      %2270 = vmatprep.subr.bf16.mxu0 0
      %2271 = vmatpush1.bf16.msra.mxu0 %v1910
      %2272 = vmatprep.subr.bf16.mxu0 0
      %2273 = vmatpush1.bf16.msra.mxu0 %v1911
      %2274 = vmatprep.subr.bf16.mxu0 0
      %2275 = vmatpush1.bf16.msra.mxu0 %v1912
      %2276 = vmatprep.subr.bf16.mxu0 0
      %2277 = vmatpush1.bf16.msra.mxu0 %v1913
      %2278 = vmatprep.subr.bf16.mxu0 0
      %2279 = vmatpush1.bf16.msra.mxu0 %v1914
      %2280 = vmatprep.subr.bf16.mxu0 0
      %2281 = vmatpush1.bf16.msra.mxu0 %v1915
      %2282 = vmatprep.subr.bf16.mxu0 0
      %2283 = vmatpush1.bf16.msra.mxu0 %v1916
      %2284 = vmatprep.subr.bf16.mxu0 0
      %2285 = vmatpush1.bf16.msra.mxu0 %v1917
      %2286 = vmatprep.subr.bf16.mxu0 0
      %2287 = vmatpush1.bf16.msra.mxu0 %v1918
      %2288 = vmatprep.subr.bf16.mxu0 0
      %2289 = vmatpush1.bf16.msra.mxu0 %v1919
      %2290 = vmatprep.subr.bf16.mxu0 0
      %2291 = vmatpush1.bf16.msra.mxu0 %v1920
      %2292 = vmatprep.subr.bf16.mxu0 0
      %2293 = vmatpush1.bf16.msra.mxu0 %v1921
      %2294 = vmatprep.mubr.bf16.mxu0 %v1060
      %2295 = vmatmul.mubr.bf16.gmra.mrb[0].mxu0 %v1059
      %v2296 = vpop.f32.mrb[0].mxu0
      %v2297 = vadd.f32 %v2256, %v2296
      %v2298 = vpop.f32.mrb[0].mxu0
      %v2299 = vpop.f32.mrb[0].mxu0
      %v2300 = vadd.f32 %v2259, %v2299
      %v2301 = vpop.f32.mrb[0].mxu0
      %2302 = vdwg.mxu0
      %2303 = vmatprep.subr.bf16.mxu0 0
      %2304 = vmatpush1.bf16.msra.mxu0 %v1922
      %2305 = vmatprep.subr.bf16.mxu0 0
      %2306 = vmatpush1.bf16.msra.mxu0 %v1923
      %2307 = vmatprep.subr.bf16.mxu0 0
      %2308 = vmatpush1.bf16.msra.mxu0 %v1924
      %2309 = vmatprep.subr.bf16.mxu0 0
      %2310 = vmatpush1.bf16.msra.mxu0 %v1925
      %2311 = vmatprep.subr.bf16.mxu0 0
      %2312 = vmatpush1.bf16.msra.mxu0 %v1926
      %2313 = vmatprep.subr.bf16.mxu0 0
      %2314 = vmatpush1.bf16.msra.mxu0 %v1927
      %2315 = vmatprep.subr.bf16.mxu0 0
      %2316 = vmatpush1.bf16.msra.mxu0 %v1928
      %2317 = vmatprep.subr.bf16.mxu0 0
      %2318 = vmatpush1.bf16.msra.mxu0 %v1929
      %2319 = vmatprep.subr.bf16.mxu0 0
      %2320 = vmatpush1.bf16.msra.mxu0 %v1930
      %2321 = vmatprep.subr.bf16.mxu0 0
      %2322 = vmatpush1.bf16.msra.mxu0 %v1931
      %2323 = vmatprep.subr.bf16.mxu0 0
      %2324 = vmatpush1.bf16.msra.mxu0 %v1932
      %2325 = vmatprep.subr.bf16.mxu0 0
      %2326 = vmatpush1.bf16.msra.mxu0 %v1933
      %2327 = vmatprep.subr.bf16.mxu0 0
      %2328 = vmatpush1.bf16.msra.mxu0 %v1934
      %2329 = vmatprep.subr.bf16.mxu0 0
      %2330 = vmatpush1.bf16.msra.mxu0 %v1935
      %2331 = vmatprep.subr.bf16.mxu0 0
      %2332 = vmatpush1.bf16.msra.mxu0 %v1936
      %2333 = vmatprep.subr.bf16.mxu0 0
      %2334 = vmatpush1.bf16.msra.mxu0 %v1937
      %2335 = vmatprep.mubr.bf16.mxu0 %v1062
      %2336 = vmatmul.mubr.bf16.gmra.mrb[0].mxu0 %v1061
      %v2337 = vpop.f32.mrb[0].mxu0
      %v2338 = vadd.f32 %v2297, %v2337
      %v2339 = vpop.f32.mrb[0].mxu0
      %v2340 = vpop.f32.mrb[0].mxu0
      %v2341 = vadd.f32 %v2300, %v2340
      %v2342 = vpop.f32.mrb[0].mxu0
      %2343 = vdwg.mxu0
      %2344 = vmatprep.subr.bf16.mxu0 0
      %2345 = vmatpush1.bf16.msra.mxu0 %v1938
      %2346 = vmatprep.subr.bf16.mxu0 0
      %2347 = vmatpush1.bf16.msra.mxu0 %v1939
      %2348 = vmatprep.subr.bf16.mxu0 0
      %2349 = vmatpush1.bf16.msra.mxu0 %v1940
      %2350 = vmatprep.subr.bf16.mxu0 0
      %2351 = vmatpush1.bf16.msra.mxu0 %v1941
      %2352 = vmatprep.subr.bf16.mxu0 0
      %2353 = vmatpush1.bf16.msra.mxu0 %v1942
      %2354 = vmatprep.subr.bf16.mxu0 0
      %2355 = vmatpush1.bf16.msra.mxu0 %v1943
      %2356 = vmatprep.subr.bf16.mxu0 0
      %2357 = vmatpush1.bf16.msra.mxu0 %v1944
      %2358 = vmatprep.subr.bf16.mxu0 0
      %2359 = vmatpush1.bf16.msra.mxu0 %v1945
      %2360 = vmatprep.subr.bf16.mxu0 0
      %2361 = vmatpush1.bf16.msra.mxu0 %v1946
      %2362 = vmatprep.subr.bf16.mxu0 0
      %2363 = vmatpush1.bf16.msra.mxu0 %v1947
      %2364 = vmatprep.subr.bf16.mxu0 0
      %2365 = vmatpush1.bf16.msra.mxu0 %v1948
      %2366 = vmatprep.subr.bf16.mxu0 0
      %2367 = vmatpush1.bf16.msra.mxu0 %v1949
      %2368 = vmatprep.subr.bf16.mxu0 0
      %2369 = vmatpush1.bf16.msra.mxu0 %v1950
      %2370 = vmatprep.subr.bf16.mxu0 0
      %2371 = vmatpush1.bf16.msra.mxu0 %v1951
      %2372 = vmatprep.subr.bf16.mxu0 0
      %2373 = vmatpush1.bf16.msra.mxu0 %v1952
      %2374 = vmatprep.subr.bf16.mxu0 0
      %2375 = vmatpush1.bf16.msra.mxu0 %v1953
      %2376 = vmatprep.mubr.bf16.mxu0 %v1064
      %2377 = vmatmul.mubr.bf16.gmra.mrb[0].mxu0 %v1063
      %v2378 = vpop.f32.mrb[0].mxu0
      %v2379 = vadd.f32 %v2338, %v2378
      %v2380 = vpop.f32.mrb[0].mxu0
      %v2381 = vpop.f32.mrb[0].mxu0
      %v2382 = vadd.f32 %v2341, %v2381
      %v2383 = vpop.f32.mrb[0].mxu0
      %2384 = vdwg.mxu0
      %2385 = vmatprep.subr.bf16.mxu0 0
      %2386 = vmatpush1.bf16.msra.mxu0 %v1954
      %2387 = vmatprep.subr.bf16.mxu0 0
      %2388 = vmatpush1.bf16.msra.mxu0 %v1955
      %2389 = vmatprep.subr.bf16.mxu0 0
      %2390 = vmatpush1.bf16.msra.mxu0 %v1956
      %2391 = vmatprep.subr.bf16.mxu0 0
      %2392 = vmatpush1.bf16.msra.mxu0 %v1957
      %2393 = vmatprep.subr.bf16.mxu0 0
      %2394 = vmatpush1.bf16.msra.mxu0 %v1958
      %2395 = vmatprep.subr.bf16.mxu0 0
      %2396 = vmatpush1.bf16.msra.mxu0 %v1959
      %2397 = vmatprep.subr.bf16.mxu0 0
      %2398 = vmatpush1.bf16.msra.mxu0 %v1960
      %2399 = vmatprep.subr.bf16.mxu0 0
      %2400 = vmatpush1.bf16.msra.mxu0 %v1961
      %2401 = vmatprep.subr.bf16.mxu0 0
      %2402 = vmatpush1.bf16.msra.mxu0 %v1962
      %2403 = vmatprep.subr.bf16.mxu0 0
      %2404 = vmatpush1.bf16.msra.mxu0 %v1963
      %2405 = vmatprep.subr.bf16.mxu0 0
      %2406 = vmatpush1.bf16.msra.mxu0 %v1964
      %2407 = vmatprep.subr.bf16.mxu0 0
      %2408 = vmatpush1.bf16.msra.mxu0 %v1965
      %2409 = vmatprep.subr.bf16.mxu0 0
      %2410 = vmatpush1.bf16.msra.mxu0 %v1966
      %2411 = vmatprep.subr.bf16.mxu0 0
      %2412 = vmatpush1.bf16.msra.mxu0 %v1967
      %2413 = vmatprep.subr.bf16.mxu0 0
      %2414 = vmatpush1.bf16.msra.mxu0 %v1968
      %2415 = vmatprep.subr.bf16.mxu0 0
      %2416 = vmatpush1.bf16.msra.mxu0 %v1969
      %2417 = vmatprep.mubr.bf16.mxu0 %v1066
      %2418 = vmatmul.mubr.bf16.gmra.mrb[0].mxu0 %v1065
      %v2419 = vpop.f32.mrb[0].mxu0
      %v2420 = vadd.f32 %v2379, %v2419
      %v2421 = vpop.f32.mrb[0].mxu0
      %v2422 = vpop.f32.mrb[0].mxu0
      %v2423 = vadd.f32 %v2382, %v2422
      %v2424 = vpop.f32.mrb[0].mxu0
      %2425 = vdwg.mxu0
      %2426 = vxpose.xlu0.b32.start [1/16] %v2420, 128
      %2427 = vxpose.xlu0.b32.cont [2/16] %v2423, 128
      %2428 = vxpose.xlu0.b32.cont [3/16] 0.0, 128
      %2429 = vxpose.xlu0.b32.cont [4/16] 0.0, 128
      %2430 = vxpose.xlu0.b32.cont [5/16] 0.0, 128
      %2431 = vxpose.xlu0.b32.cont [6/16] 0.0, 128
      %2432 = vxpose.xlu0.b32.cont [7/16] 0.0, 128
      %2433 = vxpose.xlu0.b32.cont [8/16] 0.0, 128
      %2434 = vxpose.xlu0.b32.cont [9/16] 0.0, 128
      %2435 = vxpose.xlu0.b32.cont [10/16] 0.0, 128
      %2436 = vxpose.xlu0.b32.cont [11/16] 0.0, 128
      %2437 = vxpose.xlu0.b32.cont [12/16] 0.0, 128
      %2438 = vxpose.xlu0.b32.cont [13/16] 0.0, 128
      %2439 = vxpose.xlu0.b32.cont [14/16] 0.0, 128
      %2440 = vxpose.xlu0.b32.cont [15/16] 0.0, 128
      %2441 = vxpose.xlu0.b32.end [16/16] 0.0, 128
      %v2442 = vpop.trf.xlu0
      %v2443 = vpop.trf.xlu0
      %v2444 = vpop.trf.xlu0
      %v2445 = vpop.trf.xlu0
      %v2446 = vpop.trf.xlu0
      %v2447 = vpop.trf.xlu0
      %v2448 = vpop.trf.xlu0
      %v2449 = vpop.trf.xlu0
      %v2450 = vpop.trf.xlu0
      %v2451 = vpop.trf.xlu0
      %v2452 = vpop.trf.xlu0
      %v2453 = vpop.trf.xlu0
      %v2454 = vpop.trf.xlu0
      %v2455 = vpop.trf.xlu0
      %v2456 = vpop.trf.xlu0
      %v2457 = vpop.trf.xlu0
      %vm2458 = vcmask 122880
      %2459 = vst.msk [vmem:[%s289] sm:$0x1] %vm2458, %v2442
      %p2460 = scmp.eq.s32.totalorder %s23, 0
      // Predicated region
      $region41: #{deeplabv3_multi_forward.2} parent=39 // pred_check
        %p2461 = pneg %p2460
      $region42: #{deeplabv3_multi_forward.2} parent=39 // pred_check_branch
        %2463 = sbr.rel (%p2461) target = $region44
      $region43: #{deeplabv3_multi_forward.2} parent=39 // pred_region
        %2464 = vst [vmem:[#allocation2] sm:$0x1] 0.0
      $region44: #{deeplabv3_multi_forward.2} parent=39 // pred_fallthru
        _
      %v2465 = vld [vmem:[#allocation2] sm:$0x1]
      %v2466 = vadd.f32 %v2420, %v2423
      %v2467 = vrot.slane %v2466, 4
      %v2468 = vadd.f32 %v2466, %v2467
      %v2469 = vrot.slane %v2468, 2
      %v2470 = vadd.f32 %v2468, %v2469
      %v2471 = vrot.slane %v2470, 1
      %v2472 = vadd.f32 %v2470, %v2471
      %v2473 = vadd.f32 %v2465, %v2472
      %2474 = vst [vmem:[#allocation2] sm:$0x1] %v2473
      // Predicated region
      $region45: #{deeplabv3_multi_forward.2} parent=39 // pred_check
        %p2475 = pneg %p2460
      $region46: #{deeplabv3_multi_forward.2} parent=39 // pred_check_branch
        %2477 = sbr.rel (%p2475) target = $region48
      $region47: #{deeplabv3_multi_forward.2} parent=39 // pred_region
        %v2478 = vld [vmem:[#allocation2] sm:$0x1]
        %v2479 = vmul.f32 %v2478, 0.0625
        %2480 = vst [vmem:[%s292] sm:$0x1] %v2479
      $region48: #{deeplabv3_multi_forward.2} parent=39 // pred_fallthru
        _
      %p2481 = scmp.lt.s32.totalorder %s22, 1
      %s2482 = scalar_select %p2481, %s22, 1
      %p2483 = scmp.lt.s32.totalorder %s23, 0
      %s2484 = scalar_select %p2483, %s23, 0
      %s2485 = sadd.s32 %s2484, %s2482
      %s2486 = scalar_lea.vmem %s5, %s2485
      %p2487 = scmp.lt.s32.totalorder %s22, 1
      %s2488 = scalar_select %p2487, %s22, 1
      %s2489 = scalar_lea.vmem %s6, %s2488
      // Predicated region
      $region49: #{deeplabv3_multi_forward.2} parent=39 // pred_check
        %p2490 = pneg %p162
      $region50: #{deeplabv3_multi_forward.2} parent=39 // pred_check_branch
        %2492 = sbr.rel (%p2490) target = $region52
      $region51: #{deeplabv3_multi_forward.2} parent=39 // pred_region
        _
      $region52: #{deeplabv3_multi_forward.2} parent=39 // pred_fallthru
        _
      // Predicated region
      $region53: #{deeplabv3_multi_forward.2} parent=39 // pred_check
        %p2493 = pneg %p188
      $region54: #{deeplabv3_multi_forward.2} parent=39 // pred_check_branch
        %2495 = sbr.rel (%p2493) target = $region56
      $region55: #{deeplabv3_multi_forward.2} parent=39 // pred_region
        _
      $region56: #{deeplabv3_multi_forward.2} parent=39 // pred_fallthru
        _
    $region40: #{deeplabv3_multi_forward.2} parent=5 // pred_fallthru
      _
    %p2496 = scmp.le.s32.totalorder 2, %s13
    // Predicated region
    $region57: #{deeplabv3_multi_forward.2} parent=5 // pred_check
      %p2497 = pneg %p2496
    $region58: #{deeplabv3_multi_forward.2} parent=5 // pred_check_branch
      %2499 = sbr.rel (%p2497) target = $region60
    $region59: #{deeplabv3_multi_forward.2} parent=5 // pred_region
      %s2500 = ssub.s32 %s13, 2
      // Predicated region
      $region61: #{deeplabv3_multi_forward.2} parent=59 // pred_check
        %p2501 = pneg %p168
      $region62: #{deeplabv3_multi_forward.2} parent=59 // pred_check_branch
        %2503 = sbr.rel (%p2501) target = $region64
      $region63: #{deeplabv3_multi_forward.2} parent=59 // pred_region
        %p2504 = scmp.lt.s32.totalorder %s24, 1
        %s2505 = scalar_select %p2504, %s24, 1
        %p2506 = scmp.lt.s32.totalorder %s25, 0
        %s2507 = scalar_select %p2506, %s25, 0
        %s2508 = sadd.s32 %s2507, %s2505
        %s2509 = scalar_lea.vmem %s5, %s2508
      $region64: #{deeplabv3_multi_forward.2} parent=59 // pred_fallthru
        _
      // Predicated region
      $region65: #{deeplabv3_multi_forward.2} parent=59 // pred_check
        %p2510 = pneg %p194
      $region66: #{deeplabv3_multi_forward.2} parent=59 // pred_check_branch
        %2512 = sbr.rel (%p2510) target = $region68
      $region67: #{deeplabv3_multi_forward.2} parent=59 // pred_region
        %p2513 = scmp.lt.s32.totalorder %s24, 1
        %s2514 = scalar_select %p2513, %s24, 1
        %s2515 = scalar_lea.vmem %s6, %s2514
      $region68: #{deeplabv3_multi_forward.2} parent=59 // pred_fallthru
        _
    $region60: #{deeplabv3_multi_forward.2} parent=5 // pred_fallthru
      _
  $region6: #{deeplabv3_multi_forward.2} parent=0 // loop_footer
    %s17 = sadd.s32 1, %s13
  $region7: #{deeplabv3_multi_forward.2} parent=0 // loop_footer_branch
    %12 = sbr.rel target = $region3
  $region8: #{deeplabv3_multi_forward.2} parent=0 // loop_exit
    _

</llo_original>
